<compile_context>
chip_gen: v5e
topology: v5e:2x2
jax: 0.10.0
libtpu: 0.0.40
codegen_flags: <defaults>
</compile_context>

<pallas_src>
import functools

import jax
import jax.numpy as jnp
from jax import lax
from jax.experimental import pallas as pl
from jax.experimental.pallas import tpu as pltpu

BN_EPS = 1e-5
COMPUTE_DTYPE = jnp.bfloat16   # MXU-input dtype; accumulation stays f32

STACK_ORDER = ('wqkv', 'bqkv', 'wo', 'bo', 'g1', 'be1',
               'w1', 'b1', 'w2', 'b2', 'g2', 'be2')


def _gelu_tanh(x):
    # tanh-approx GELU (== torch.nn.GELU(approximate='tanh')); deviation from the exact
    # erf GELU is ~3e-4 abs, well inside the check tolerance.  tanh runs on the EUP slot.
    c = 0.7978845608028654  # sqrt(2/pi)
    return 0.5 * x * (1.0 + jnp.tanh(c * (x + 0.044715 * (x * x * x))))


def _batchnorm(x2d, gamma, beta):
    # Transpose(1,2) -> BatchNorm1d(d_model) -> Transpose(1,2), training mode:
    # per-channel mean / biased variance over all bs*q_len tokens.
    mean = jnp.mean(x2d, axis=0, keepdims=True)
    var = jnp.mean(jnp.square(x2d - mean), axis=0, keepdims=True)
    return (x2d - mean) * lax.rsqrt(var + BN_EPS) * gamma + beta


def _layer_math(x2d, wqkv, bqkv, wo, bo, g1, be1, w1, b1, w2, b2, g2, be2,
                *, bs, q_len, n_heads, recip):
    """One TSTEncoderLayer on a [bs*q_len, d_model] activation block.

    All math is f32; MXU operands are cast to the (bf16) weight dtype.  `recip(x)`
    supplies the reciprocal (pl.reciprocal inside the kernel, 1/x in the reference)."""
    L, H = q_len, n_heads
    D = wo.shape[-1]
    dk = D // H
    scale = float(dk) ** -0.5
    cdt = wqkv.dtype                              # bf16 compute dtype for MXU operands

    # ---- fused QKV projection: one wide matmul, then three static width-D splits ----
    qkv = jnp.dot(x2d.astype(cdt), wqkv, preferred_element_type=jnp.float32) + bqkv
    q = qkv[:, 0 * D:1 * D].reshape(bs, L, D)
    k = qkv[:, 1 * D:2 * D].reshape(bs, L, D)
    v = qkv[:, 2 * D:3 * D].reshape(bs, L, D)

    # ---- all heads at once: per-head channel masks + merged (head, batch) einsums ----
    ch = lax.broadcasted_iota(jnp.int32, (H, D), 1)
    hh = lax.broadcasted_iota(jnp.int32, (H, D), 0)
    lo = hh * dk
    hmask = jnp.logical_and(ch >= lo, ch < lo + dk).astype(jnp.float32)   # [H, D]

    qm = (q[None, :, :, :] * hmask[:, None, None, :]).reshape(H * bs, L, D)
    kb = jnp.broadcast_to(k[None, :, :, :], (H, bs, L, D)).reshape(H * bs, L, D)
    vm = (v[None, :, :, :] * hmask[:, None, None, :]).reshape(H * bs, L, D)

    scores = jnp.einsum('bqd,bkd->bqk', qm.astype(cdt), kb.astype(cdt),
                        preferred_element_type=jnp.float32) * scale       # [H*bs, L, L]
    m = jnp.max(scores, axis=-1, keepdims=True)
    p = jnp.exp(scores - m)
    attn = p * recip(jnp.sum(p, axis=-1, keepdims=True))
    ctx = jnp.einsum('bqk,bkd->bqd', attn.astype(cdt), vm.astype(cdt),
                     preferred_element_type=jnp.float32)                  # [H*bs, L, D]
    # each head occupies disjoint (masked) channels -> summing over heads == concat(heads)
    ctx2d = jnp.sum(ctx.reshape(H, bs * L, D), axis=0)                    # [bs*L, D]

    src2 = jnp.dot(ctx2d.astype(cdt), wo, preferred_element_type=jnp.float32) + bo
    x = _batchnorm(x2d + src2, g1, be1)           # residual (dropout=0) + norm_attn

    # ---- position-wise feed-forward ----
    h1 = _gelu_tanh(jnp.dot(x.astype(cdt), w1, preferred_element_type=jnp.float32) + b1)
    y = jnp.dot(h1.astype(cdt), w2, preferred_element_type=jnp.float32) + b2
    x = _batchnorm(x + y, g2, be2)                # residual (dropout=0) + norm_ffn
    return x


def _tst_encoder_kernel(src_ref, wqkv_ref, bqkv_ref, wo_ref, bo_ref,
                        g1_ref, be1_ref, w1_ref, b1_ref, w2_ref, b2_ref,
                        g2_ref, be2_ref, out_ref, *, n_heads):
    # Grid axis 0 = encoder layer (sequential).  The activation block lives in the
    # output VMEM block across layer iterations (constant output block index).
    @pl.when(pl.program_id(0) == 0)
    def _():
        out_ref[...] = src_ref[...]

    bs, q_len, d_model = out_ref.shape
    x2d = out_ref[...].astype(jnp.float32).reshape(bs * q_len, d_model)
    y2d = _layer_math(x2d,
                      wqkv_ref[...], bqkv_ref[...], wo_ref[...], bo_ref[...],
                      g1_ref[...], be1_ref[...], w1_ref[...], b1_ref[...],
                      w2_ref[...], b2_ref[...], g2_ref[...], be2_ref[...],
                      bs=bs, q_len=q_len, n_heads=n_heads,
                      recip=lambda t: pl.reciprocal(t, approx=True))
    out_ref[...] = y2d.reshape(bs, q_len, d_model).astype(out_ref.dtype)


def tst_encoder(src, stacked, n_heads, adp=None):
    """src: [bs, q_len, d_model]; stacked: dict from stack_layer_params.
    Runs every TSTEncoderLayer inside a single Pallas call."""
    # TODO(synk): the MultiheadAttention source (and its use of `adp`) is not in the
    # provided reference; only the adp=None path is implemented.  store_attn's attention
    # weights are likewise not returned.
    assert adp is None, "adp path not implemented"
    bs, q_len, d_model = src.shape
    n_layers = stacked['wqkv'].shape[0]

    def w_spec(arr):
        # per-layer block: squeeze the layer axis, full extent on the remaining dims
        return pl.BlockSpec((None,) + arr.shape[1:], lambda l: (l, 0, 0))

    act_spec = pl.BlockSpec((bs, q_len, d_model), lambda l: (0, 0, 0))
    in_specs = [act_spec] + [w_spec(stacked[k]) for k in STACK_ORDER]

    return pl.pallas_call(
        functools.partial(_tst_encoder_kernel, n_heads=n_heads),
        out_shape=jax.ShapeDtypeStruct((bs, q_len, d_model), src.dtype),
        grid=(n_layers,),
        in_specs=in_specs,
        out_specs=act_spec,
        compiler_params=pltpu.CompilerParams(
            dimension_semantics=("arbitrary",),   # sequential layer dependency
        ),
    )(src, *(stacked[k] for k in STACK_ORDER))


def tst_encoder_ref(src, stacked, n_heads):
    # pure-JAX (no Pallas) reference running identical math (incl. bf16 MXU inputs),
    # except an exact reciprocal in the softmax.
    bs, q_len, d_model = src.shape
    n_layers = stacked['wqkv'].shape[0]
    x2d = src.reshape(bs * q_len, d_model).astype(jnp.float32)
    for l in range(n_layers):
        args = [stacked[k][l] for k in STACK_ORDER]
        x2d = _layer_math(x2d, *args, bs=bs, q_len=q_len, n_heads=n_heads,
                          recip=lambda t: 1.0 / t)
    return x2d.reshape(bs, q_len, d_model).astype(src.dtype)


def init_layer_params(key, d_model, d_ff):
    # PyTorch nn.Linear default init; weights stored [in, out] so y = x @ W + b.
    ks = jax.random.split(key, 6)

    def lin(k, fan_in, fan_out):
        bound = float(fan_in) ** -0.5
        kw, kb = jax.random.split(k)
        w = jax.random.uniform(kw, (fan_in, fan_out), jnp.float32, -bound, bound)
        b = jax.random.uniform(kb, (1, fan_out), jnp.float32, -bound, bound)
        return w, b

    wq, bq = lin(ks[0], d_model, d_model)
    wk, bk = lin(ks[1], d_model, d_model)
    wv, bv = lin(ks[2], d_model, d_model)
    wo, bo = lin(ks[3], d_model, d_model)
    w1, b1 = lin(ks[4], d_model, d_ff)
    w2, b2 = lin(ks[5], d_ff, d_model)
    ones = jnp.ones((1, d_model), jnp.float32)
    zeros = jnp.zeros((1, d_model), jnp.float32)
    return dict(wq=wq, bq=bq, wk=wk, bk=bk, wv=wv, bv=bv, wo=wo, bo=bo,
                g1=ones, be1=zeros, w1=w1, b1=b1, w2=w2, b2=b2,
                g2=ones, be2=zeros)


def stack_layer_params(layer_params_list, compute_dtype=COMPUTE_DTYPE):
    """Stack per-layer params on a leading layer axis, fuse Q/K/V weights into one
    [d_model, 3*d_model] matrix, and pre-cast matmul weights to the MXU compute dtype
    (halves weight DMA bytes; biases/BN params stay f32)."""
    def st(name):
        return jnp.stack([p[name] for p in layer_params_list], axis=0)

    wqkv = jnp.concatenate([st('wq'), st('wk'), st('wv')], axis=-1)
    bqkv = jnp.concatenate([st('bq'), st('bk'), st('bv')], axis=-1)
    return dict(
        wqkv=wqkv.astype(compute_dtype), bqkv=bqkv,
        wo=st('wo').astype(compute_dtype), bo=st('bo'),
        g1=st('g1'), be1=st('be1'),
        w1=st('w1').astype(compute_dtype), b1=st('b1'),
        w2=st('w2').astype(compute_dtype), b2=st('b2'),
        g2=st('g2'), be2=st('be2'),
    )


if __name__ == "__main__":
    bs, q_len, d_model, n_heads, d_ff, n_layers = 2, 8, 32, 4, 64, 2

    key = jax.random.PRNGKey(0)
    k_src, k_par = jax.random.split(key)
    src = jax.random.normal(k_src, (bs, q_len, d_model), jnp.float32)

    layer_keys = jax.random.split(k_par, n_layers)
    stacked = stack_layer_params(
        [init_layer_params(k, d_model, d_ff) for k in layer_keys])

    out = jax.block_until_ready(tst_encoder(src, stacked, n_heads))
    ref = jax.block_until_ready(tst_encoder_ref(src, stacked, n_heads))

    assert out.shape == (bs, q_len, d_model)
    assert bool(jnp.all(jnp.isfinite(out)))
    # Kernel and reference run identical math except pl.reciprocal(approx=True) in the
    # softmax, so 2e-2 is an ample yet still bug-catching tolerance.
    assert bool(jnp.allclose(out, ref, atol=2e-2, rtol=2e-2)), \
        float(jnp.max(jnp.abs(out - ref)))

    print("KERNEL_OK")
</pallas_src>

<mosaic_0001>
module attributes {stable_mosaic.version = 11 : i64} {
  func.func @_tst_encoder_kernel(%arg0: i32, %arg1: memref<2x8x32xf32, #tpu.memory_space<vmem>>, %arg2: memref<1x32x96xbf16, #tpu.memory_space<vmem>>, %arg3: memref<1x1x96xf32, #tpu.memory_space<vmem>>, %arg4: memref<1x32x32xbf16, #tpu.memory_space<vmem>>, %arg5: memref<1x1x32xf32, #tpu.memory_space<vmem>>, %arg6: memref<1x1x32xf32, #tpu.memory_space<vmem>>, %arg7: memref<1x1x32xf32, #tpu.memory_space<vmem>>, %arg8: memref<1x32x64xbf16, #tpu.memory_space<vmem>>, %arg9: memref<1x1x64xf32, #tpu.memory_space<vmem>>, %arg10: memref<1x64x32xbf16, #tpu.memory_space<vmem>>, %arg11: memref<1x1x32xf32, #tpu.memory_space<vmem>>, %arg12: memref<1x1x32xf32, #tpu.memory_space<vmem>>, %arg13: memref<1x1x32xf32, #tpu.memory_space<vmem>>, %arg14: memref<2x8x32xf32, #tpu.memory_space<vmem>>) attributes {dimension_semantics = [#tpu.dimension_semantics<arbitrary>], iteration_bounds = array<i64: 2>, scalar_prefetch = 0 : i64, scratch_operands = 0 : i64, tpu.core_type = #tpu.core_type<tc>, window_params = [{pipeline_mode = #tpu.pipeline_mode<synchronous>, transform_indices = @transform_0, window_bounds = array<i64: 2, 8, 32>}, {transform_indices = @transform_1, window_bounds = array<i64: 1, 32, 96>}, {transform_indices = @transform_2, window_bounds = array<i64: 1, 1, 96>}, {transform_indices = @transform_3, window_bounds = array<i64: 1, 32, 32>}, {transform_indices = @transform_4, window_bounds = array<i64: 1, 1, 32>}, {transform_indices = @transform_5, window_bounds = array<i64: 1, 1, 32>}, {transform_indices = @transform_6, window_bounds = array<i64: 1, 1, 32>}, {transform_indices = @transform_7, window_bounds = array<i64: 1, 32, 64>}, {transform_indices = @transform_8, window_bounds = array<i64: 1, 1, 64>}, {transform_indices = @transform_9, window_bounds = array<i64: 1, 64, 32>}, {transform_indices = @transform_10, window_bounds = array<i64: 1, 1, 32>}, {transform_indices = @transform_11, window_bounds = array<i64: 1, 1, 32>}, {transform_indices = @transform_12, window_bounds = array<i64: 1, 1, 32>}, {pipeline_mode = #tpu.pipeline_mode<synchronous>, transform_indices = @transform_13, window_bounds = array<i64: 2, 8, 32>}]} {
    %c0_i32 = arith.constant 0 : i32
    %0 = arith.cmpi eq, %arg0, %c0_i32 : i32
    %1 = arith.extui %0 : i1 to i32
    %c0_i32_0 = arith.constant 0 : i32
    %2 = arith.cmpi ne, %1, %c0_i32_0 : i32
    scf.if %2 {
      %c0_66 = arith.constant 0 : index
      %c0_67 = arith.constant 0 : index
      %c0_68 = arith.constant 0 : index
      %159 = vector.load %arg1[%c0_66, %c0_67, %c0_68] : memref<2x8x32xf32, #tpu.memory_space<vmem>>, vector<2x8x32xf32>
      %c0_69 = arith.constant 0 : index
      %c0_70 = arith.constant 0 : index
      %c0_71 = arith.constant 0 : index
      %160 = vector.load %arg14[%c0_69, %c0_70, %c0_71] : memref<2x8x32xf32, #tpu.memory_space<vmem>>, vector<2x8x32xf32>
      tpu.vector_store %arg14[%c0_69, %c0_70, %c0_71], %159 {strides = array<i32>} : memref<2x8x32xf32, #tpu.memory_space<vmem>>, vector<2x8x32xf32>,
    } else {
    }
    %c0 = arith.constant 0 : index
    %c0_1 = arith.constant 0 : index
    %c0_2 = arith.constant 0 : index
    %3 = vector.load %arg14[%c0, %c0_1, %c0_2] : memref<2x8x32xf32, #tpu.memory_space<vmem>>, vector<2x8x32xf32>
    %4 = vector.shape_cast %3 : vector<2x8x32xf32> to vector<16x32xf32>
    %c0_3 = arith.constant 0 : index
    %c0_4 = arith.constant 0 : index
    %c0_5 = arith.constant 0 : index
    %5 = vector.load %arg2[%c0_3, %c0_4, %c0_5] : memref<1x32x96xbf16, #tpu.memory_space<vmem>>, vector<1x32x96xbf16>
    %6 = vector.shape_cast %5 : vector<1x32x96xbf16> to vector<32x96xbf16>
    %c0_6 = arith.constant 0 : index
    %c0_7 = arith.constant 0 : index
    %c0_8 = arith.constant 0 : index
    %7 = vector.load %arg3[%c0_6, %c0_7, %c0_8] : memref<1x1x96xf32, #tpu.memory_space<vmem>>, vector<1x1x96xf32>
    %8 = vector.shape_cast %7 : vector<1x1x96xf32> to vector<1x96xf32>
    %c0_9 = arith.constant 0 : index
    %c0_10 = arith.constant 0 : index
    %c0_11 = arith.constant 0 : index
    %9 = vector.load %arg4[%c0_9, %c0_10, %c0_11] : memref<1x32x32xbf16, #tpu.memory_space<vmem>>, vector<1x32x32xbf16>
    %10 = vector.shape_cast %9 : vector<1x32x32xbf16> to vector<32x32xbf16>
    %c0_12 = arith.constant 0 : index
    %c0_13 = arith.constant 0 : index
    %c0_14 = arith.constant 0 : index
    %11 = vector.load %arg5[%c0_12, %c0_13, %c0_14] : memref<1x1x32xf32, #tpu.memory_space<vmem>>, vector<1x1x32xf32>
    %12 = vector.shape_cast %11 : vector<1x1x32xf32> to vector<1x32xf32>
    %c0_15 = arith.constant 0 : index
    %c0_16 = arith.constant 0 : index
    %c0_17 = arith.constant 0 : index
    %13 = vector.load %arg6[%c0_15, %c0_16, %c0_17] : memref<1x1x32xf32, #tpu.memory_space<vmem>>, vector<1x1x32xf32>
    %14 = vector.shape_cast %13 : vector<1x1x32xf32> to vector<1x32xf32>
    %c0_18 = arith.constant 0 : index
    %c0_19 = arith.constant 0 : index
    %c0_20 = arith.constant 0 : index
    %15 = vector.load %arg7[%c0_18, %c0_19, %c0_20] : memref<1x1x32xf32, #tpu.memory_space<vmem>>, vector<1x1x32xf32>
    %16 = vector.shape_cast %15 : vector<1x1x32xf32> to vector<1x32xf32>
    %c0_21 = arith.constant 0 : index
    %c0_22 = arith.constant 0 : index
    %c0_23 = arith.constant 0 : index
    %17 = vector.load %arg8[%c0_21, %c0_22, %c0_23] : memref<1x32x64xbf16, #tpu.memory_space<vmem>>, vector<1x32x64xbf16>
    %18 = vector.shape_cast %17 : vector<1x32x64xbf16> to vector<32x64xbf16>
    %c0_24 = arith.constant 0 : index
    %c0_25 = arith.constant 0 : index
    %c0_26 = arith.constant 0 : index
    %19 = vector.load %arg9[%c0_24, %c0_25, %c0_26] : memref<1x1x64xf32, #tpu.memory_space<vmem>>, vector<1x1x64xf32>
    %20 = vector.shape_cast %19 : vector<1x1x64xf32> to vector<1x64xf32>
    %c0_27 = arith.constant 0 : index
    %c0_28 = arith.constant 0 : index
    %c0_29 = arith.constant 0 : index
    %21 = vector.load %arg10[%c0_27, %c0_28, %c0_29] : memref<1x64x32xbf16, #tpu.memory_space<vmem>>, vector<1x64x32xbf16>
    %22 = vector.shape_cast %21 : vector<1x64x32xbf16> to vector<64x32xbf16>
    %c0_30 = arith.constant 0 : index
    %c0_31 = arith.constant 0 : index
    %c0_32 = arith.constant 0 : index
    %23 = vector.load %arg11[%c0_30, %c0_31, %c0_32] : memref<1x1x32xf32, #tpu.memory_space<vmem>>, vector<1x1x32xf32>
    %24 = vector.shape_cast %23 : vector<1x1x32xf32> to vector<1x32xf32>
    %c0_33 = arith.constant 0 : index
    %c0_34 = arith.constant 0 : index
    %c0_35 = arith.constant 0 : index
    %25 = vector.load %arg12[%c0_33, %c0_34, %c0_35] : memref<1x1x32xf32, #tpu.memory_space<vmem>>, vector<1x1x32xf32>
    %26 = vector.shape_cast %25 : vector<1x1x32xf32> to vector<1x32xf32>
    %c0_36 = arith.constant 0 : index
    %c0_37 = arith.constant 0 : index
    %c0_38 = arith.constant 0 : index
    %27 = vector.load %arg13[%c0_36, %c0_37, %c0_38] : memref<1x1x32xf32, #tpu.memory_space<vmem>>, vector<1x1x32xf32>
    %28 = vector.shape_cast %27 : vector<1x1x32xf32> to vector<1x32xf32>
    %29 = arith.truncf %4 : vector<16x32xf32> to vector<16x32xbf16>
    %cst = arith.constant dense<0.000000e+00> : vector<16x96xf32>
    %30 = tpu.matmul %29, %6, %cst {dimension_numbers = #tpu.dot_dimension_numbers<[1], [0], [0], [1], [0, 0, 1, 1], [], []>} : vector<16x32xbf16>, vector<32x96xbf16>, vector<16x96xf32> -> vector<16x96xf32>
    %31 = vector.broadcast %8 : vector<1x96xf32> to vector<16x96xf32>
    %32 = arith.addf %30, %31 : vector<16x96xf32>
    %33 = vector.extract_strided_slice %32 {offsets = [0, 0], sizes = [16, 32], strides = [1, 1]} : vector<16x96xf32> to vector<16x32xf32>
    %34 = vector.shape_cast %33 : vector<16x32xf32> to vector<2x8x32xf32>
    %35 = vector.extract_strided_slice %32 {offsets = [0, 32], sizes = [16, 32], strides = [1, 1]} : vector<16x96xf32> to vector<16x32xf32>
    %36 = vector.shape_cast %35 : vector<16x32xf32> to vector<2x8x32xf32>
    %37 = vector.extract_strided_slice %32 {offsets = [0, 64], sizes = [16, 32], strides = [1, 1]} : vector<16x96xf32> to vector<16x32xf32>
    %38 = vector.shape_cast %37 : vector<16x32xf32> to vector<2x8x32xf32>
    %39 = tpu.iota {dimensions = array<i32: 1>} : vector<4x32xi32>
    %40 = tpu.iota {dimensions = array<i32: 0>} : vector<4x32xi32>
    %c8_i32 = arith.constant 8 : i32
    %41 = vector.broadcast %c8_i32 : i32 to vector<4x32xi32>
    %42 = arith.muli %40, %41 : vector<4x32xi32>
    %43 = arith.cmpi sge, %39, %42 : vector<4x32xi32>
    %c8_i32_39 = arith.constant 8 : i32
    %44 = vector.broadcast %c8_i32_39 : i32 to vector<4x32xi32>
    %45 = arith.addi %42, %44 : vector<4x32xi32>
    %46 = arith.cmpi slt, %39, %45 : vector<4x32xi32>
    %47 = arith.andi %43, %46 : vector<4x32xi1>
    %48 = arith.extui %47 : vector<4x32xi1> to vector<4x32xi32>
    %49 = arith.sitofp %48 : vector<4x32xi32> to vector<4x32xf32>
    %50 = vector.shape_cast %34 : vector<2x8x32xf32> to vector<1x2x8x32xf32>
    %51 = vector.shape_cast %49 : vector<4x32xf32> to vector<4x1x1x32xf32>
    %52 = vector.broadcast %50 : vector<1x2x8x32xf32> to vector<4x2x8x32xf32>
    %53 = vector.broadcast %51 : vector<4x1x1x32xf32> to vector<4x2x8x32xf32>
    %54 = arith.mulf %52, %53 : vector<4x2x8x32xf32>
    %55 = vector.shape_cast %54 : vector<4x2x8x32xf32> to vector<8x8x32xf32>
    %56 = vector.shape_cast %36 : vector<2x8x32xf32> to vector<1x2x8x32xf32>
    %57 = vector.shape_cast %56 : vector<1x2x8x32xf32> to vector<1x2x8x32xf32>
    %58 = vector.broadcast %57 : vector<1x2x8x32xf32> to vector<4x2x8x32xf32>
    %59 = vector.shape_cast %58 : vector<4x2x8x32xf32> to vector<8x8x32xf32>
    %60 = vector.shape_cast %38 : vector<2x8x32xf32> to vector<1x2x8x32xf32>
    %61 = vector.shape_cast %49 : vector<4x32xf32> to vector<4x1x1x32xf32>
    %62 = vector.broadcast %60 : vector<1x2x8x32xf32> to vector<4x2x8x32xf32>
    %63 = vector.broadcast %61 : vector<4x1x1x32xf32> to vector<4x2x8x32xf32>
    %64 = arith.mulf %62, %63 : vector<4x2x8x32xf32>
    %65 = vector.shape_cast %64 : vector<4x2x8x32xf32> to vector<8x8x32xf32>
    %66 = arith.truncf %55 : vector<8x8x32xf32> to vector<8x8x32xbf16>
    %67 = arith.truncf %59 : vector<8x8x32xf32> to vector<8x8x32xbf16>
    "tpu.trace_start"() <{level = 10 : i32, message = "bqd,bkd->bqk"}> : () -> ()
    %cst_40 = arith.constant dense<0.000000e+00> : vector<8x8x8xf32>
    %68 = tpu.matmul %66, %67, %cst_40 {dimension_numbers = #tpu.dot_dimension_numbers<[2], [2], [1], [1], [0, 0, 0, 1, 1, 1], [0], [0]>} : vector<8x8x32xbf16>, vector<8x8x32xbf16>, vector<8x8x8xf32> -> vector<8x8x8xf32>
    "tpu.trace_stop"() : () -> ()
    %cst_41 = arith.constant 0.353553385 : f32
    %69 = vector.broadcast %cst_41 : f32 to vector<8x8x8xf32>
    %70 = arith.mulf %68, %69 : vector<8x8x8xf32>
    %cst_42 = arith.constant dense<0xFF800000> : vector<8x8xf32>
    %71 = vector.multi_reduction <maximumf>, %70, %cst_42 [2] : vector<8x8x8xf32> to vector<8x8xf32>
    %72 = vector.shape_cast %71 : vector<8x8xf32> to vector<8x8x1xf32>
    %73 = vector.broadcast %72 : vector<8x8x1xf32> to vector<8x8x8xf32>
    %74 = arith.subf %70, %73 : vector<8x8x8xf32>
    %75 = math.exp %74 : vector<8x8x8xf32>
    %cst_43 = arith.constant dense<0.000000e+00> : vector<8x8xf32>
    %76 = vector.multi_reduction <add>, %75, %cst_43 [2] : vector<8x8x8xf32> to vector<8x8xf32>
    %77 = vector.shape_cast %76 : vector<8x8xf32> to vector<8x8x1xf32>
    %78 = tpu.reciprocal %77 {approx = true} : vector<8x8x1xf32> -> vector<8x8x1xf32>
    %79 = vector.broadcast %78 : vector<8x8x1xf32> to vector<8x8x8xf32>
    %80 = arith.mulf %75, %79 : vector<8x8x8xf32>
    %81 = arith.truncf %80 : vector<8x8x8xf32> to vector<8x8x8xbf16>
    %82 = arith.truncf %65 : vector<8x8x32xf32> to vector<8x8x32xbf16>
    "tpu.trace_start"() <{level = 10 : i32, message = "bqk,bkd->bqd"}> : () -> ()
    %cst_44 = arith.constant dense<0.000000e+00> : vector<8x8x32xf32>
    %83 = tpu.matmul %81, %82, %cst_44 {dimension_numbers = #tpu.dot_dimension_numbers<[2], [1], [1], [2], [0, 0, 0, 1, 1, 2], [0], [0]>} : vector<8x8x8xbf16>, vector<8x8x32xbf16>, vector<8x8x32xf32> -> vector<8x8x32xf32>
    "tpu.trace_stop"() : () -> ()
    %84 = vector.shape_cast %83 : vector<8x8x32xf32> to vector<4x16x32xf32>
    %cst_45 = arith.constant dense<0.000000e+00> : vector<16x32xf32>
    %85 = vector.multi_reduction <add>, %84, %cst_45 [0] : vector<4x16x32xf32> to vector<16x32xf32>
    %86 = arith.truncf %85 : vector<16x32xf32> to vector<16x32xbf16>
    %cst_46 = arith.constant dense<0.000000e+00> : vector<16x32xf32>
    %87 = tpu.matmul %86, %10, %cst_46 {dimension_numbers = #tpu.dot_dimension_numbers<[1], [0], [0], [1], [0, 0, 1, 1], [], []>} : vector<16x32xbf16>, vector<32x32xbf16>, vector<16x32xf32> -> vector<16x32xf32>
    %88 = vector.broadcast %12 : vector<1x32xf32> to vector<16x32xf32>
    %89 = arith.addf %87, %88 : vector<16x32xf32>
    %90 = arith.addf %4, %89 : vector<16x32xf32>
    %cst_47 = arith.constant dense<0.000000e+00> : vector<32xf32>
    %91 = vector.multi_reduction <add>, %90, %cst_47 [0] : vector<16x32xf32> to vector<32xf32>
    %92 = vector.shape_cast %91 : vector<32xf32> to vector<1x32xf32>
    %cst_48 = arith.constant 1.600000e+01 : f32
    %93 = vector.broadcast %cst_48 : f32 to vector<1x32xf32>
    %94 = arith.divf %92, %93 : vector<1x32xf32>
    %95 = vector.broadcast %94 : vector<1x32xf32> to vector<16x32xf32>
    %96 = arith.subf %90, %95 : vector<16x32xf32>
    %97 = arith.mulf %96, %96 : vector<16x32xf32>
    %cst_49 = arith.constant dense<0.000000e+00> : vector<32xf32>
    %98 = vector.multi_reduction <add>, %97, %cst_49 [0] : vector<16x32xf32> to vector<32xf32>
    %99 = vector.shape_cast %98 : vector<32xf32> to vector<1x32xf32>
    %cst_50 = arith.constant 1.600000e+01 : f32
    %100 = vector.broadcast %cst_50 : f32 to vector<1x32xf32>
    %101 = arith.divf %99, %100 : vector<1x32xf32>
    %102 = vector.broadcast %94 : vector<1x32xf32> to vector<16x32xf32>
    %103 = arith.subf %90, %102 : vector<16x32xf32>
    %cst_51 = arith.constant 9.99999974E-6 : f32
    %104 = vector.broadcast %cst_51 : f32 to vector<1x32xf32>
    %105 = arith.addf %101, %104 : vector<1x32xf32>
    %106 = math.rsqrt %105 : vector<1x32xf32>
    %107 = vector.broadcast %106 : vector<1x32xf32> to vector<16x32xf32>
    %108 = arith.mulf %103, %107 : vector<16x32xf32>
    %109 = vector.broadcast %14 : vector<1x32xf32> to vector<16x32xf32>
    %110 = arith.mulf %108, %109 : vector<16x32xf32>
    %111 = vector.broadcast %16 : vector<1x32xf32> to vector<16x32xf32>
    %112 = arith.addf %110, %111 : vector<16x32xf32>
    %113 = arith.truncf %112 : vector<16x32xf32> to vector<16x32xbf16>
    %cst_52 = arith.constant dense<0.000000e+00> : vector<16x64xf32>
    %114 = tpu.matmul %113, %18, %cst_52 {dimension_numbers = #tpu.dot_dimension_numbers<[1], [0], [0], [1], [0, 0, 1, 1], [], []>} : vector<16x32xbf16>, vector<32x64xbf16>, vector<16x64xf32> -> vector<16x64xf32>
    %115 = vector.broadcast %20 : vector<1x64xf32> to vector<16x64xf32>
    %116 = arith.addf %114, %115 : vector<16x64xf32>
    %cst_53 = arith.constant 5.000000e-01 : f32
    %117 = vector.broadcast %cst_53 : f32 to vector<16x64xf32>
    %118 = arith.mulf %117, %116 : vector<16x64xf32>
    %119 = arith.mulf %116, %116 : vector<16x64xf32>
    %120 = arith.mulf %119, %116 : vector<16x64xf32>
    %cst_54 = arith.constant 4.471500e-02 : f32
    %121 = vector.broadcast %cst_54 : f32 to vector<16x64xf32>
    %122 = arith.mulf %121, %120 : vector<16x64xf32>
    %123 = arith.addf %116, %122 : vector<16x64xf32>
    %cst_55 = arith.constant 0.797884583 : f32
    %124 = vector.broadcast %cst_55 : f32 to vector<16x64xf32>
    %125 = arith.mulf %124, %123 : vector<16x64xf32>
    %126 = math.tanh %125 : vector<16x64xf32>
    %cst_56 = arith.constant 1.000000e+00 : f32
    %127 = vector.broadcast %cst_56 : f32 to vector<16x64xf32>
    %128 = arith.addf %127, %126 : vector<16x64xf32>
    %129 = arith.mulf %118, %128 : vector<16x64xf32>
    %130 = arith.truncf %129 : vector<16x64xf32> to vector<16x64xbf16>
    %cst_57 = arith.constant dense<0.000000e+00> : vector<16x32xf32>
    %131 = tpu.matmul %130, %22, %cst_57 {dimension_numbers = #tpu.dot_dimension_numbers<[1], [0], [0], [1], [0, 0, 1, 1], [], []>} : vector<16x64xbf16>, vector<64x32xbf16>, vector<16x32xf32> -> vector<16x32xf32>
    %132 = vector.broadcast %24 : vector<1x32xf32> to vector<16x32xf32>
    %133 = arith.addf %131, %132 : vector<16x32xf32>
    %134 = arith.addf %112, %133 : vector<16x32xf32>
    %cst_58 = arith.constant dense<0.000000e+00> : vector<32xf32>
    %135 = vector.multi_reduction <add>, %134, %cst_58 [0] : vector<16x32xf32> to vector<32xf32>
    %136 = vector.shape_cast %135 : vector<32xf32> to vector<1x32xf32>
    %cst_59 = arith.constant 1.600000e+01 : f32
    %137 = vector.broadcast %cst_59 : f32 to vector<1x32xf32>
    %138 = arith.divf %136, %137 : vector<1x32xf32>
    %139 = vector.broadcast %138 : vector<1x32xf32> to vector<16x32xf32>
    %140 = arith.subf %134, %139 : vector<16x32xf32>
    %141 = arith.mulf %140, %140 : vector<16x32xf32>
    %cst_60 = arith.constant dense<0.000000e+00> : vector<32xf32>
    %142 = vector.multi_reduction <add>, %141, %cst_60 [0] : vector<16x32xf32> to vector<32xf32>
    %143 = vector.shape_cast %142 : vector<32xf32> to vector<1x32xf32>
    %cst_61 = arith.constant 1.600000e+01 : f32
    %144 = vector.broadcast %cst_61 : f32 to vector<1x32xf32>
    %145 = arith.divf %143, %144 : vector<1x32xf32>
    %146 = vector.broadcast %138 : vector<1x32xf32> to vector<16x32xf32>
    %147 = arith.subf %134, %146 : vector<16x32xf32>
    %cst_62 = arith.constant 9.99999974E-6 : f32
    %148 = vector.broadcast %cst_62 : f32 to vector<1x32xf32>
    %149 = arith.addf %145, %148 : vector<1x32xf32>
    %150 = math.rsqrt %149 : vector<1x32xf32>
    %151 = vector.broadcast %150 : vector<1x32xf32> to vector<16x32xf32>
    %152 = arith.mulf %147, %151 : vector<16x32xf32>
    %153 = vector.broadcast %26 : vector<1x32xf32> to vector<16x32xf32>
    %154 = arith.mulf %152, %153 : vector<16x32xf32>
    %155 = vector.broadcast %28 : vector<1x32xf32> to vector<16x32xf32>
    %156 = arith.addf %154, %155 : vector<16x32xf32>
    %157 = vector.shape_cast %156 : vector<16x32xf32> to vector<2x8x32xf32>
    %c0_63 = arith.constant 0 : index
    %c0_64 = arith.constant 0 : index
    %c0_65 = arith.constant 0 : index
    %158 = vector.load %arg14[%c0_63, %c0_64, %c0_65] : memref<2x8x32xf32, #tpu.memory_space<vmem>>, vector<2x8x32xf32>
    tpu.vector_store %arg14[%c0_63, %c0_64, %c0_65], %157 {strides = array<i32>} : memref<2x8x32xf32, #tpu.memory_space<vmem>>, vector<2x8x32xf32>,
    return
  }
  func.func @transform_0(%arg0: i32) -> (i32, i32, i32) {
    %c0_i32 = arith.constant 0 : i32
    %c0_i32_0 = arith.constant 0 : i32
    %c0_i32_1 = arith.constant 0 : i32
    %c0_i32_2 = arith.constant 0 : i32
    return %c0_i32, %c0_i32_0, %c0_i32_1 : i32, i32, i32
  }
  func.func @transform_1(%arg0: i32) -> (i32, i32, i32) {
    %c0_i32 = arith.constant 0 : i32
    %c0_i32_0 = arith.constant 0 : i32
    %c0_i32_1 = arith.constant 0 : i32
    return %arg0, %c0_i32, %c0_i32_0 : i32, i32, i32
  }
  func.func @transform_2(%arg0: i32) -> (i32, i32, i32) {
    %c0_i32 = arith.constant 0 : i32
    %c0_i32_0 = arith.constant 0 : i32
    %c0_i32_1 = arith.constant 0 : i32
    return %arg0, %c0_i32, %c0_i32_0 : i32, i32, i32
  }
  func.func @transform_3(%arg0: i32) -> (i32, i32, i32) {
    %c0_i32 = arith.constant 0 : i32
    %c0_i32_0 = arith.constant 0 : i32
    %c0_i32_1 = arith.constant 0 : i32
    return %arg0, %c0_i32, %c0_i32_0 : i32, i32, i32
  }
  func.func @transform_4(%arg0: i32) -> (i32, i32, i32) {
    %c0_i32 = arith.constant 0 : i32
    %c0_i32_0 = arith.constant 0 : i32
    %c0_i32_1 = arith.constant 0 : i32
    return %arg0, %c0_i32, %c0_i32_0 : i32, i32, i32
  }
  func.func @transform_5(%arg0: i32) -> (i32, i32, i32) {
    %c0_i32 = arith.constant 0 : i32
    %c0_i32_0 = arith.constant 0 : i32
    %c0_i32_1 = arith.constant 0 : i32
    return %arg0, %c0_i32, %c0_i32_0 : i32, i32, i32
  }
  func.func @transform_6(%arg0: i32) -> (i32, i32, i32) {
    %c0_i32 = arith.constant 0 : i32
    %c0_i32_0 = arith.constant 0 : i32
    %c0_i32_1 = arith.constant 0 : i32
    return %arg0, %c0_i32, %c0_i32_0 : i32, i32, i32
  }
  func.func @transform_7(%arg0: i32) -> (i32, i32, i32) {
    %c0_i32 = arith.constant 0 : i32
    %c0_i32_0 = arith.constant 0 : i32
    %c0_i32_1 = arith.constant 0 : i32
    return %arg0, %c0_i32, %c0_i32_0 : i32, i32, i32
  }
  func.func @transform_8(%arg0: i32) -> (i32, i32, i32) {
    %c0_i32 = arith.constant 0 : i32
    %c0_i32_0 = arith.constant 0 : i32
    %c0_i32_1 = arith.constant 0 : i32
    return %arg0, %c0_i32, %c0_i32_0 : i32, i32, i32
  }
  func.func @transform_9(%arg0: i32) -> (i32, i32, i32) {
    %c0_i32 = arith.constant 0 : i32
    %c0_i32_0 = arith.constant 0 : i32
    %c0_i32_1 = arith.constant 0 : i32
    return %arg0, %c0_i32, %c0_i32_0 : i32, i32, i32
  }
  func.func @transform_10(%arg0: i32) -> (i32, i32, i32) {
    %c0_i32 = arith.constant 0 : i32
    %c0_i32_0 = arith.constant 0 : i32
    %c0_i32_1 = arith.constant 0 : i32
    return %arg0, %c0_i32, %c0_i32_0 : i32, i32, i32
  }
  func.func @transform_11(%arg0: i32) -> (i32, i32, i32) {
    %c0_i32 = arith.constant 0 : i32
    %c0_i32_0 = arith.constant 0 : i32
    %c0_i32_1 = arith.constant 0 : i32
    return %arg0, %c0_i32, %c0_i32_0 : i32, i32, i32
  }
  func.func @transform_12(%arg0: i32) -> (i32, i32, i32) {
    %c0_i32 = arith.constant 0 : i32
    %c0_i32_0 = arith.constant 0 : i32
    %c0_i32_1 = arith.constant 0 : i32
    return %arg0, %c0_i32, %c0_i32_0 : i32, i32, i32
  }
  func.func @transform_13(%arg0: i32) -> (i32, i32, i32) {
    %c0_i32 = arith.constant 0 : i32
    %c0_i32_0 = arith.constant 0 : i32
    %c0_i32_1 = arith.constant 0 : i32
    %c0_i32_2 = arith.constant 0 : i32
    return %c0_i32, %c0_i32_0, %c0_i32_1 : i32, i32, i32
  }
}

</mosaic_0001>

<llo_original>
// kernel: tpu_custom_call.1
$region0: #{tpu_custom_call.1}
  #allocation0 [shape = 'u32[]', space=smem, size = 0x4, offset = 0x4, fixed_abs, tag = 'smem constant byte address 0x4 - core index']
  #allocation1 [shape = 'u32[72,128]{1,0:T(1,128)}', space=vmem, size = 0x9000, scoped, tag = 'internal scratch']
  %s0 = inlined_call_operand.hbm [shape: f32[2,8,32], index: 0, kind: input, shape index: {}]
  %s1 = inlined_call_operand.vmem [shape: bf16[2,32,96], index: 1, kind: input, shape index: {}]
  %s2 = inlined_call_operand.hbm [shape: f32[2,1,96], index: 2, kind: input, shape index: {}]
  %s3 = inlined_call_operand.vmem [shape: bf16[2,32,32], index: 3, kind: input, shape index: {}]
  %s4 = inlined_call_operand.vmem [shape: f32[2,1,32], index: 4, kind: input, shape index: {}]
  %s5 = inlined_call_operand.hbm [shape: f32[2,1,32], index: 5, kind: input, shape index: {}]
  %s6 = inlined_call_operand.vmem [shape: f32[2,1,32], index: 6, kind: input, shape index: {}]
  %s7 = inlined_call_operand.vmem [shape: bf16[2,32,64], index: 7, kind: input, shape index: {}]
  %s8 = inlined_call_operand.vmem [shape: f32[2,1,64], index: 8, kind: input, shape index: {}]
  %s9 = inlined_call_operand.vmem [shape: bf16[2,64,32], index: 9, kind: input, shape index: {}]
  %s10 = inlined_call_operand.vmem [shape: f32[2,1,32], index: 10, kind: input, shape index: {}]
  %s11 = inlined_call_operand.hbm [shape: f32[2,1,32], index: 11, kind: input, shape index: {}]
  %s12 = inlined_call_operand.vmem [shape: f32[2,1,32], index: 12, kind: input, shape index: {}]
  %s13 = inlined_call_operand.hbm [shape: f32[2,8,32], index: 13, kind: output, shape index: {}]
  %s14 = sld [smem:[#allocation0]]
  $region105: #{tpu_custom_call.1} parent=0
    _
  %s16 = ssub.s32 1, %s14
  %s17 = scalar_select 0, %s16, %s14
  $region1: #{tpu_custom_call.1} parent=0
    #allocation2 [shape = 'u8[8192]{0}', space=vmem, size = 0x2000, scoped, tag = 'input window, operand 0, single buffered']
    #allocation3 [shape = 's32[2]{0}', space=sflag, size = 0x8, scoped, tag = 'scoped memory for tpu_custom_call.1']
    #allocation4 [shape = 's32[2]{0}', space=sflag, size = 0x8, scoped, tag = 'scoped memory for tpu_custom_call.1']
    #allocation5 [shape = 'u8[1024]{0}', space=vmem, size = 0x400, scoped, tag = 'input window, operand 2']
    #allocation6 [shape = 's32[2]{0}', space=sflag, size = 0x8, scoped, tag = 'scoped memory for tpu_custom_call.1']
    #allocation7 [shape = 'u8[1024]{0}', space=vmem, size = 0x400, scoped, tag = 'input window, operand 5']
    #allocation8 [shape = 'u8[1024]{0}', space=vmem, size = 0x400, scoped, tag = 'input window, operand 11']
    #allocation9 [shape = 's32[2]{0}', space=sflag, size = 0x8, scoped, tag = 'scoped memory for tpu_custom_call.1']
    #allocation10 [shape = 'u8[8192]{0}', space=vmem, size = 0x2000, scoped, tag = 'output window, operand 0, single buffered']
    %18 = vsyncpa [#allocation3], 0
    %19 = vsyncpa [#allocation6], 0
    %s20 = scalar_lea.sflag [#allocation6], 1
    %21 = vsyncpa %s20, 0
    %22 = vsyncpa [#allocation9], 0
    %s23 = scalar_lea.sflag [#allocation9], 1
    %24 = vsyncpa %s23, 0
    %25 = vsyncpa [#allocation4], 0
    loop: start=0, step=1, limit=4
    $region2: #{tpu_custom_call.1} parent=1 // loop_pre_header
      _
    $region3: #{tpu_custom_call.1} parent=1 // loop_header
      %s27 = sphi 0, %s31
      %p28 = scmp.ge.s32.totalorder %s27, 4
      %s35 = sphi 0, %s35
      %s37 = sphi 0, %s35
      %s38 = sphi 0, %s37
      %s52 = sphi 0, %s38
      %s58 = sphi 0, %s60
      %s61 = sphi 0, %s58
      %s62 = sphi 0, %s61
      %s78 = sphi 0, %s62
      %s84 = sphi 0, %s86
      %s87 = sphi 0, %s84
      %s88 = sphi 0, %s87
      %s104 = sphi 0, %s88
      %s110 = sphi 0, %s112
      %s113 = sphi 0, %s110
      %s114 = sphi 0, %s113
      %s130 = sphi 0, %s114
      %s136 = sphi 0, %s138
      %s139 = sphi 0, %s136
      %s140 = sphi 0, %s139
      %s156 = sphi 0, %s140
      %s162 = sphi 0, %s164
      %s165 = sphi 0, %s162
      %s166 = sphi 0, %s165
      %s182 = sphi 0, %s166
      %s188 = sphi 0, %s190
      %s191 = sphi 0, %s188
      %s192 = sphi 0, %s191
      %s208 = sphi 0, %s192
      %s214 = sphi 0, %s216
      %s217 = sphi 0, %s214
      %s218 = sphi 0, %s217
      %s234 = sphi 0, %s218
      %s240 = sphi 0, %s242
      %s243 = sphi 0, %s240
      %s244 = sphi 0, %s243
      %s260 = sphi 0, %s244
      %s266 = sphi 0, %s268
      %s269 = sphi 0, %s266
      %s270 = sphi 0, %s269
      %s286 = sphi 0, %s270
      %s292 = sphi 0, %s294
      %s295 = sphi 0, %s292
      %s296 = sphi 0, %s295
      %s312 = sphi 0, %s296
      %s318 = sphi 0, %s320
      %s321 = sphi 0, %s318
      %s322 = sphi 0, %s321
      %s338 = sphi 0, %s322
      %s344 = sphi 0, %s346
      %s347 = sphi 0, %s344
      %s348 = sphi 0, %s347
      %s364 = sphi 0, %s348
      %s368 = sphi 0, %s368
      %s370 = sphi 0, %s368
      %s371 = sphi 0, %s370
      %s385 = sphi 0, %s371
    $region4: #{tpu_custom_call.1} parent=1 // loop_header_branch
      %30 = sbr.rel (%p28) target = $region8
    $region5: #{tpu_custom_call.1} parent=1 // loop_body
      %s32 = ssub.s32 %s27, 1
      %s33 = ssub.s32 %s27, 2
      %s34 = sadd.s32 %s27, 1
      %s36 = sadd.s32 %s35, 1
      %p39 = scmp.eq.s32.totalorder %s27, 1
      %p40 = scmp.ne.s32.totalorder %s35, %s37
      %p41 = scmp.eq.s32.totalorder %s27, 0
      %p42 = por %p40, %p41
      %p43 = scmp.ne.s32.totalorder %s35, %s37
      %p44 = scmp.eq.s32.totalorder %s32, 1
      %p45 = por %p43, %p44
      %p46 = scmp.ne.s32.totalorder %s37, %s38
      %p47 = scmp.eq.s32.totalorder %s32, 0
      %p48 = por %p46, %p47
      %p49 = scmp.ne.s32.totalorder %s37, %s38
      %p50 = scmp.eq.s32.totalorder %s33, 1
      %p51 = por %p49, %p50
      %p53 = scmp.ne.s32.totalorder %s38, %s52
      %p54 = scmp.eq.s32.totalorder %s33, 0
      %p55 = por %p53, %p54
      %s56 = ssub.s32 %s27, %s34
      %p57 = scmp.eq.s32.totalorder %s56, 0
      %s59 = sadd.s32 %s58, 1
      %s60 = scalar_select %p57, %s58, %s59
      %p63 = pneg %p57
      %p64 = scmp.eq.s32.totalorder %s27, 1
      %p65 = por %p63, %p64
      %p66 = scmp.ne.s32.totalorder %s58, %s61
      %p67 = scmp.eq.s32.totalorder %s27, 0
      %p68 = por %p66, %p67
      %p69 = scmp.ne.s32.totalorder %s58, %s61
      %p70 = scmp.eq.s32.totalorder %s32, 1
      %p71 = por %p69, %p70
      %p72 = scmp.ne.s32.totalorder %s61, %s62
      %p73 = scmp.eq.s32.totalorder %s32, 0
      %p74 = por %p72, %p73
      %p75 = scmp.ne.s32.totalorder %s61, %s62
      %p76 = scmp.eq.s32.totalorder %s33, 1
      %p77 = por %p75, %p76
      %p79 = scmp.ne.s32.totalorder %s62, %s78
      %p80 = scmp.eq.s32.totalorder %s33, 0
      %p81 = por %p79, %p80
      %s82 = ssub.s32 %s27, %s34
      %p83 = scmp.eq.s32.totalorder %s82, 0
      %s85 = sadd.s32 %s84, 1
      %s86 = scalar_select %p83, %s84, %s85
      %p89 = pneg %p83
      %p90 = scmp.eq.s32.totalorder %s27, 1
      %p91 = por %p89, %p90
      %p92 = scmp.ne.s32.totalorder %s84, %s87
      %p93 = scmp.eq.s32.totalorder %s27, 0
      %p94 = por %p92, %p93
      %p95 = scmp.ne.s32.totalorder %s84, %s87
      %p96 = scmp.eq.s32.totalorder %s32, 1
      %p97 = por %p95, %p96
      %p98 = scmp.ne.s32.totalorder %s87, %s88
      %p99 = scmp.eq.s32.totalorder %s32, 0
      %p100 = por %p98, %p99
      %p101 = scmp.ne.s32.totalorder %s87, %s88
      %p102 = scmp.eq.s32.totalorder %s33, 1
      %p103 = por %p101, %p102
      %p105 = scmp.ne.s32.totalorder %s88, %s104
      %p106 = scmp.eq.s32.totalorder %s33, 0
      %p107 = por %p105, %p106
      %s108 = ssub.s32 %s27, %s34
      %p109 = scmp.eq.s32.totalorder %s108, 0
      %s111 = sadd.s32 %s110, 1
      %s112 = scalar_select %p109, %s110, %s111
      %p115 = pneg %p109
      %p116 = scmp.eq.s32.totalorder %s27, 1
      %p117 = por %p115, %p116
      %p118 = scmp.ne.s32.totalorder %s110, %s113
      %p119 = scmp.eq.s32.totalorder %s27, 0
      %p120 = por %p118, %p119
      %p121 = scmp.ne.s32.totalorder %s110, %s113
      %p122 = scmp.eq.s32.totalorder %s32, 1
      %p123 = por %p121, %p122
      %p124 = scmp.ne.s32.totalorder %s113, %s114
      %p125 = scmp.eq.s32.totalorder %s32, 0
      %p126 = por %p124, %p125
      %p127 = scmp.ne.s32.totalorder %s113, %s114
      %p128 = scmp.eq.s32.totalorder %s33, 1
      %p129 = por %p127, %p128
      %p131 = scmp.ne.s32.totalorder %s114, %s130
      %p132 = scmp.eq.s32.totalorder %s33, 0
      %p133 = por %p131, %p132
      %s134 = ssub.s32 %s27, %s34
      %p135 = scmp.eq.s32.totalorder %s134, 0
      %s137 = sadd.s32 %s136, 1
      %s138 = scalar_select %p135, %s136, %s137
      %p141 = pneg %p135
      %p142 = scmp.eq.s32.totalorder %s27, 1
      %p143 = por %p141, %p142
      %p144 = scmp.ne.s32.totalorder %s136, %s139
      %p145 = scmp.eq.s32.totalorder %s27, 0
      %p146 = por %p144, %p145
      %p147 = scmp.ne.s32.totalorder %s136, %s139
      %p148 = scmp.eq.s32.totalorder %s32, 1
      %p149 = por %p147, %p148
      %p150 = scmp.ne.s32.totalorder %s139, %s140
      %p151 = scmp.eq.s32.totalorder %s32, 0
      %p152 = por %p150, %p151
      %p153 = scmp.ne.s32.totalorder %s139, %s140
      %p154 = scmp.eq.s32.totalorder %s33, 1
      %p155 = por %p153, %p154
      %p157 = scmp.ne.s32.totalorder %s140, %s156
      %p158 = scmp.eq.s32.totalorder %s33, 0
      %p159 = por %p157, %p158
      %s160 = ssub.s32 %s27, %s34
      %p161 = scmp.eq.s32.totalorder %s160, 0
      %s163 = sadd.s32 %s162, 1
      %s164 = scalar_select %p161, %s162, %s163
      %p167 = pneg %p161
      %p168 = scmp.eq.s32.totalorder %s27, 1
      %p169 = por %p167, %p168
      %p170 = scmp.ne.s32.totalorder %s162, %s165
      %p171 = scmp.eq.s32.totalorder %s27, 0
      %p172 = por %p170, %p171
      %p173 = scmp.ne.s32.totalorder %s162, %s165
      %p174 = scmp.eq.s32.totalorder %s32, 1
      %p175 = por %p173, %p174
      %p176 = scmp.ne.s32.totalorder %s165, %s166
      %p177 = scmp.eq.s32.totalorder %s32, 0
      %p178 = por %p176, %p177
      %p179 = scmp.ne.s32.totalorder %s165, %s166
      %p180 = scmp.eq.s32.totalorder %s33, 1
      %p181 = por %p179, %p180
      %p183 = scmp.ne.s32.totalorder %s166, %s182
      %p184 = scmp.eq.s32.totalorder %s33, 0
      %p185 = por %p183, %p184
      %s186 = ssub.s32 %s27, %s34
      %p187 = scmp.eq.s32.totalorder %s186, 0
      %s189 = sadd.s32 %s188, 1
      %s190 = scalar_select %p187, %s188, %s189
      %p193 = pneg %p187
      %p194 = scmp.eq.s32.totalorder %s27, 1
      %p195 = por %p193, %p194
      %p196 = scmp.ne.s32.totalorder %s188, %s191
      %p197 = scmp.eq.s32.totalorder %s27, 0
      %p198 = por %p196, %p197
      %p199 = scmp.ne.s32.totalorder %s188, %s191
      %p200 = scmp.eq.s32.totalorder %s32, 1
      %p201 = por %p199, %p200
      %p202 = scmp.ne.s32.totalorder %s191, %s192
      %p203 = scmp.eq.s32.totalorder %s32, 0
      %p204 = por %p202, %p203
      %p205 = scmp.ne.s32.totalorder %s191, %s192
      %p206 = scmp.eq.s32.totalorder %s33, 1
      %p207 = por %p205, %p206
      %p209 = scmp.ne.s32.totalorder %s192, %s208
      %p210 = scmp.eq.s32.totalorder %s33, 0
      %p211 = por %p209, %p210
      %s212 = ssub.s32 %s27, %s34
      %p213 = scmp.eq.s32.totalorder %s212, 0
      %s215 = sadd.s32 %s214, 1
      %s216 = scalar_select %p213, %s214, %s215
      %p219 = pneg %p213
      %p220 = scmp.eq.s32.totalorder %s27, 1
      %p221 = por %p219, %p220
      %p222 = scmp.ne.s32.totalorder %s214, %s217
      %p223 = scmp.eq.s32.totalorder %s27, 0
      %p224 = por %p222, %p223
      %p225 = scmp.ne.s32.totalorder %s214, %s217
      %p226 = scmp.eq.s32.totalorder %s32, 1
      %p227 = por %p225, %p226
      %p228 = scmp.ne.s32.totalorder %s217, %s218
      %p229 = scmp.eq.s32.totalorder %s32, 0
      %p230 = por %p228, %p229
      %p231 = scmp.ne.s32.totalorder %s217, %s218
      %p232 = scmp.eq.s32.totalorder %s33, 1
      %p233 = por %p231, %p232
      %p235 = scmp.ne.s32.totalorder %s218, %s234
      %p236 = scmp.eq.s32.totalorder %s33, 0
      %p237 = por %p235, %p236
      %s238 = ssub.s32 %s27, %s34
      %p239 = scmp.eq.s32.totalorder %s238, 0
      %s241 = sadd.s32 %s240, 1
      %s242 = scalar_select %p239, %s240, %s241
      %p245 = pneg %p239
      %p246 = scmp.eq.s32.totalorder %s27, 1
      %p247 = por %p245, %p246
      %p248 = scmp.ne.s32.totalorder %s240, %s243
      %p249 = scmp.eq.s32.totalorder %s27, 0
      %p250 = por %p248, %p249
      %p251 = scmp.ne.s32.totalorder %s240, %s243
      %p252 = scmp.eq.s32.totalorder %s32, 1
      %p253 = por %p251, %p252
      %p254 = scmp.ne.s32.totalorder %s243, %s244
      %p255 = scmp.eq.s32.totalorder %s32, 0
      %p256 = por %p254, %p255
      %p257 = scmp.ne.s32.totalorder %s243, %s244
      %p258 = scmp.eq.s32.totalorder %s33, 1
      %p259 = por %p257, %p258
      %p261 = scmp.ne.s32.totalorder %s244, %s260
      %p262 = scmp.eq.s32.totalorder %s33, 0
      %p263 = por %p261, %p262
      %s264 = ssub.s32 %s27, %s34
      %p265 = scmp.eq.s32.totalorder %s264, 0
      %s267 = sadd.s32 %s266, 1
      %s268 = scalar_select %p265, %s266, %s267
      %p271 = pneg %p265
      %p272 = scmp.eq.s32.totalorder %s27, 1
      %p273 = por %p271, %p272
      %p274 = scmp.ne.s32.totalorder %s266, %s269
      %p275 = scmp.eq.s32.totalorder %s27, 0
      %p276 = por %p274, %p275
      %p277 = scmp.ne.s32.totalorder %s266, %s269
      %p278 = scmp.eq.s32.totalorder %s32, 1
      %p279 = por %p277, %p278
      %p280 = scmp.ne.s32.totalorder %s269, %s270
      %p281 = scmp.eq.s32.totalorder %s32, 0
      %p282 = por %p280, %p281
      %p283 = scmp.ne.s32.totalorder %s269, %s270
      %p284 = scmp.eq.s32.totalorder %s33, 1
      %p285 = por %p283, %p284
      %p287 = scmp.ne.s32.totalorder %s270, %s286
      %p288 = scmp.eq.s32.totalorder %s33, 0
      %p289 = por %p287, %p288
      %s290 = ssub.s32 %s27, %s34
      %p291 = scmp.eq.s32.totalorder %s290, 0
      %s293 = sadd.s32 %s292, 1
      %s294 = scalar_select %p291, %s292, %s293
      %p297 = pneg %p291
      %p298 = scmp.eq.s32.totalorder %s27, 1
      %p299 = por %p297, %p298
      %p300 = scmp.ne.s32.totalorder %s292, %s295
      %p301 = scmp.eq.s32.totalorder %s27, 0
      %p302 = por %p300, %p301
      %p303 = scmp.ne.s32.totalorder %s292, %s295
      %p304 = scmp.eq.s32.totalorder %s32, 1
      %p305 = por %p303, %p304
      %p306 = scmp.ne.s32.totalorder %s295, %s296
      %p307 = scmp.eq.s32.totalorder %s32, 0
      %p308 = por %p306, %p307
      %p309 = scmp.ne.s32.totalorder %s295, %s296
      %p310 = scmp.eq.s32.totalorder %s33, 1
      %p311 = por %p309, %p310
      %p313 = scmp.ne.s32.totalorder %s296, %s312
      %p314 = scmp.eq.s32.totalorder %s33, 0
      %p315 = por %p313, %p314
      %s316 = ssub.s32 %s27, %s34
      %p317 = scmp.eq.s32.totalorder %s316, 0
      %s319 = sadd.s32 %s318, 1
      %s320 = scalar_select %p317, %s318, %s319
      %p323 = pneg %p317
      %p324 = scmp.eq.s32.totalorder %s27, 1
      %p325 = por %p323, %p324
      %p326 = scmp.ne.s32.totalorder %s318, %s321
      %p327 = scmp.eq.s32.totalorder %s27, 0
      %p328 = por %p326, %p327
      %p329 = scmp.ne.s32.totalorder %s318, %s321
      %p330 = scmp.eq.s32.totalorder %s32, 1
      %p331 = por %p329, %p330
      %p332 = scmp.ne.s32.totalorder %s321, %s322
      %p333 = scmp.eq.s32.totalorder %s32, 0
      %p334 = por %p332, %p333
      %p335 = scmp.ne.s32.totalorder %s321, %s322
      %p336 = scmp.eq.s32.totalorder %s33, 1
      %p337 = por %p335, %p336
      %p339 = scmp.ne.s32.totalorder %s322, %s338
      %p340 = scmp.eq.s32.totalorder %s33, 0
      %p341 = por %p339, %p340
      %s342 = ssub.s32 %s27, %s34
      %p343 = scmp.eq.s32.totalorder %s342, 0
      %s345 = sadd.s32 %s344, 1
      %s346 = scalar_select %p343, %s344, %s345
      %p349 = pneg %p343
      %p350 = scmp.eq.s32.totalorder %s27, 1
      %p351 = por %p349, %p350
      %p352 = scmp.ne.s32.totalorder %s344, %s347
      %p353 = scmp.eq.s32.totalorder %s27, 0
      %p354 = por %p352, %p353
      %p355 = scmp.ne.s32.totalorder %s344, %s347
      %p356 = scmp.eq.s32.totalorder %s32, 1
      %p357 = por %p355, %p356
      %p358 = scmp.ne.s32.totalorder %s347, %s348
      %p359 = scmp.eq.s32.totalorder %s32, 0
      %p360 = por %p358, %p359
      %p361 = scmp.ne.s32.totalorder %s347, %s348
      %p362 = scmp.eq.s32.totalorder %s33, 1
      %p363 = por %p361, %p362
      %p365 = scmp.ne.s32.totalorder %s348, %s364
      %p366 = scmp.eq.s32.totalorder %s33, 0
      %p367 = por %p365, %p366
      %s369 = sadd.s32 %s368, 1
      %p372 = scmp.eq.s32.totalorder %s27, 1
      %p373 = scmp.ne.s32.totalorder %s368, %s370
      %p374 = scmp.eq.s32.totalorder %s27, 0
      %p375 = por %p373, %p374
      %p376 = scmp.ne.s32.totalorder %s368, %s370
      %p377 = scmp.eq.s32.totalorder %s32, 1
      %p378 = por %p376, %p377
      %p379 = scmp.ne.s32.totalorder %s370, %s371
      %p380 = scmp.eq.s32.totalorder %s32, 0
      %p381 = por %p379, %p380
      %p382 = scmp.ne.s32.totalorder %s370, %s371
      %p383 = scmp.eq.s32.totalorder %s33, 1
      %p384 = por %p382, %p383
      %p386 = scmp.ne.s32.totalorder %s371, %s385
      %p387 = scmp.eq.s32.totalorder %s33, 0
      %p388 = por %p386, %p387
      %p389 = scmp.le.s32.totalorder 1, %s27
      %p390 = scmp.lt.s32.totalorder %s27, 3
      %p391 = pnand %p389, %p390
      %p392 = pneg %p391
      // Predicated region
      $region9: #{tpu_custom_call.1} parent=5 // pred_check
        _
      $region10: #{tpu_custom_call.1} parent=5 // pred_check_branch
        %394 = sbr.rel (%p391) target = $region12
      $region11: #{tpu_custom_call.1} parent=5 // pred_region
        %s395 = ssub.s32 %s27, 1
        // Predicated region
        $region13: #{tpu_custom_call.1} parent=11 // pred_check
          %p396 = pneg %p48
        $region14: #{tpu_custom_call.1} parent=11 // pred_check_branch
          %398 = sbr.rel (%p396) target = $region16
        $region15: #{tpu_custom_call.1} parent=11 // pred_region
          %400 = vsyncadd [#allocation3], 0
          %s401 = sshll.u32 %s0, 4
          %s402 = int_to_ptr.hbm [resolvable:$true] %s401
          %s403 = sshll.u32 [#allocation2], 4
          %s404 = int_to_ptr.vmem [resolvable:$true] %s403
          %409 = dma.hbm_to_vmem [thread:$0]  %s402, 256, %s404, [#allocation3], 128, 128, 8
        $region16: #{tpu_custom_call.1} parent=11 // pred_fallthru
          _
      $region12: #{tpu_custom_call.1} parent=5 // pred_fallthru
        _
      %p410 = scmp.lt.s32.totalorder %s27, 2
      // Predicated region
      $region17: #{tpu_custom_call.1} parent=5 // pred_check
        %p411 = pneg %p410
      $region18: #{tpu_custom_call.1} parent=5 // pred_check_branch
        %413 = sbr.rel (%p411) target = $region20
      $region19: #{tpu_custom_call.1} parent=5 // pred_region
        // Predicated region
        $region21: #{tpu_custom_call.1} parent=19 // pred_check
          %p414 = pneg %p68
        $region22: #{tpu_custom_call.1} parent=19 // pred_check_branch
          %416 = sbr.rel (%p414) target = $region24
        $region23: #{tpu_custom_call.1} parent=19 // pred_region
          %p417 = scmp.lt.s32.totalorder %s27, 1
          %s418 = scalar_select %p417, %s27, 1
          %s419 = smul.addr %s418, 4
          %s420 = smul.addr %s419, 4
          %s421 = scalar_lea.vmem %s1, %s420
        $region24: #{tpu_custom_call.1} parent=19 // pred_fallthru
          _
        // Predicated region
        $region25: #{tpu_custom_call.1} parent=19 // pred_check
          %p422 = pneg %p94
        $region26: #{tpu_custom_call.1} parent=19 // pred_check_branch
          %424 = sbr.rel (%p422) target = $region28
        $region27: #{tpu_custom_call.1} parent=19 // pred_region
          %s425 = sand.u32 %s27, 1
          %s426 = scalar_lea.sflag [#allocation6], %s425
          %s427 = sand.u32 %s84, 1
          %s428 = scalar_lea.vmem [#allocation5], %s427
          %430 = vsyncadd %s426, 0
          %s431 = scalar_lea.hbm %s2, %s27
          %s433 = sshll.u32 %s431, 4
          %s434 = int_to_ptr.hbm [resolvable:$true] %s433
          %s435 = sshll.u32 %s428, 4
          %s436 = int_to_ptr.vmem [resolvable:$true] %s435
          %438 = dma.hbm_to_vmem [thread:$0]  %s434, 16, %s436, %s426
        $region28: #{tpu_custom_call.1} parent=19 // pred_fallthru
          _
        // Predicated region
        $region29: #{tpu_custom_call.1} parent=19 // pred_check
          %p439 = pneg %p120
        $region30: #{tpu_custom_call.1} parent=19 // pred_check_branch
          %441 = sbr.rel (%p439) target = $region32
        $region31: #{tpu_custom_call.1} parent=19 // pred_region
          %p442 = scmp.lt.s32.totalorder %s27, 1
          %s443 = scalar_select %p442, %s27, 1
          %s444 = smul.addr %s443, 4
          %s445 = smul.addr %s444, 4
          %s446 = scalar_lea.vmem %s3, %s445
        $region32: #{tpu_custom_call.1} parent=19 // pred_fallthru
          _
        // Predicated region
        $region33: #{tpu_custom_call.1} parent=19 // pred_check
          %p447 = pneg %p146
        $region34: #{tpu_custom_call.1} parent=19 // pred_check_branch
          %449 = sbr.rel (%p447) target = $region36
        $region35: #{tpu_custom_call.1} parent=19 // pred_region
          %p450 = scmp.lt.s32.totalorder %s27, 1
          %s451 = scalar_select %p450, %s27, 1
          %s452 = scalar_lea.vmem %s4, %s451
        $region36: #{tpu_custom_call.1} parent=19 // pred_fallthru
          _
        // Predicated region
        $region37: #{tpu_custom_call.1} parent=19 // pred_check
          %p453 = pneg %p172
        $region38: #{tpu_custom_call.1} parent=19 // pred_check_branch
          %455 = sbr.rel (%p453) target = $region40
        $region39: #{tpu_custom_call.1} parent=19 // pred_region
          %s456 = sand.u32 %s27, 1
          %s457 = scalar_lea.sflag [#allocation6], %s456
          %s458 = sand.u32 %s162, 1
          %s459 = scalar_lea.vmem [#allocation7], %s458
          %461 = vsyncadd %s457, 0
          %s462 = scalar_lea.hbm %s5, %s27
          %s464 = sshll.u32 %s462, 4
          %s465 = int_to_ptr.hbm [resolvable:$true] %s464
          %s466 = sshll.u32 %s459, 4
          %s467 = int_to_ptr.vmem [resolvable:$true] %s466
          %469 = dma.hbm_to_vmem [thread:$0]  %s465, 16, %s467, %s457
        $region40: #{tpu_custom_call.1} parent=19 // pred_fallthru
          _
        // Predicated region
        $region41: #{tpu_custom_call.1} parent=19 // pred_check
          %p470 = pneg %p198
        $region42: #{tpu_custom_call.1} parent=19 // pred_check_branch
          %472 = sbr.rel (%p470) target = $region44
        $region43: #{tpu_custom_call.1} parent=19 // pred_region
          %p473 = scmp.lt.s32.totalorder %s27, 1
          %s474 = scalar_select %p473, %s27, 1
          %s475 = scalar_lea.vmem %s6, %s474
        $region44: #{tpu_custom_call.1} parent=19 // pred_fallthru
          _
        // Predicated region
        $region45: #{tpu_custom_call.1} parent=19 // pred_check
          %p476 = pneg %p224
        $region46: #{tpu_custom_call.1} parent=19 // pred_check_branch
          %478 = sbr.rel (%p476) target = $region48
        $region47: #{tpu_custom_call.1} parent=19 // pred_region
          %p479 = scmp.lt.s32.totalorder %s27, 1
          %s480 = scalar_select %p479, %s27, 1
          %s481 = smul.addr %s480, 4
          %s482 = smul.addr %s481, 4
          %s483 = scalar_lea.vmem %s7, %s482
        $region48: #{tpu_custom_call.1} parent=19 // pred_fallthru
          _
        // Predicated region
        $region49: #{tpu_custom_call.1} parent=19 // pred_check
          %p484 = pneg %p250
        $region50: #{tpu_custom_call.1} parent=19 // pred_check_branch
          %486 = sbr.rel (%p484) target = $region52
        $region51: #{tpu_custom_call.1} parent=19 // pred_region
          %p487 = scmp.lt.s32.totalorder %s27, 1
          %s488 = scalar_select %p487, %s27, 1
          %s489 = scalar_lea.vmem %s8, %s488
        $region52: #{tpu_custom_call.1} parent=19 // pred_fallthru
          _
        // Predicated region
        $region53: #{tpu_custom_call.1} parent=19 // pred_check
          %p490 = pneg %p276
        $region54: #{tpu_custom_call.1} parent=19 // pred_check_branch
          %492 = sbr.rel (%p490) target = $region56
        $region55: #{tpu_custom_call.1} parent=19 // pred_region
          %p493 = scmp.lt.s32.totalorder %s27, 1
          %s494 = scalar_select %p493, %s27, 1
          %s495 = smul.addr %s494, 8
          %s496 = smul.addr %s495, 4
          %s497 = scalar_lea.vmem %s9, %s496
        $region56: #{tpu_custom_call.1} parent=19 // pred_fallthru
          _
        // Predicated region
        $region57: #{tpu_custom_call.1} parent=19 // pred_check
          %p498 = pneg %p302
        $region58: #{tpu_custom_call.1} parent=19 // pred_check_branch
          %500 = sbr.rel (%p498) target = $region60
        $region59: #{tpu_custom_call.1} parent=19 // pred_region
          %p501 = scmp.lt.s32.totalorder %s27, 1
          %s502 = scalar_select %p501, %s27, 1
          %s503 = scalar_lea.vmem %s10, %s502
        $region60: #{tpu_custom_call.1} parent=19 // pred_fallthru
          _
        // Predicated region
        $region61: #{tpu_custom_call.1} parent=19 // pred_check
          %p504 = pneg %p328
        $region62: #{tpu_custom_call.1} parent=19 // pred_check_branch
          %506 = sbr.rel (%p504) target = $region64
        $region63: #{tpu_custom_call.1} parent=19 // pred_region
          %s507 = sand.u32 %s318, 1
          %s508 = scalar_lea.sflag [#allocation9], %s507
          %s509 = sand.u32 %s318, 1
          %s510 = scalar_lea.vmem [#allocation8], %s509
          %512 = vsyncadd %s508, 0
          %s513 = scalar_lea.hbm %s11, %s27
          %s515 = sshll.u32 %s513, 4
          %s516 = int_to_ptr.hbm [resolvable:$true] %s515
          %s517 = sshll.u32 %s510, 4
          %s518 = int_to_ptr.vmem [resolvable:$true] %s517
          %520 = dma.hbm_to_vmem [thread:$0]  %s516, 16, %s518, %s508
        $region64: #{tpu_custom_call.1} parent=19 // pred_fallthru
          _
        // Predicated region
        $region65: #{tpu_custom_call.1} parent=19 // pred_check
          %p521 = pneg %p354
        $region66: #{tpu_custom_call.1} parent=19 // pred_check_branch
          %523 = sbr.rel (%p521) target = $region68
        $region67: #{tpu_custom_call.1} parent=19 // pred_region
          %p524 = scmp.lt.s32.totalorder %s27, 1
          %s525 = scalar_select %p524, %s27, 1
          %s526 = scalar_lea.vmem %s12, %s525
        $region68: #{tpu_custom_call.1} parent=19 // pred_fallthru
          _
      $region20: #{tpu_custom_call.1} parent=5 // pred_fallthru
        _
      %p527 = scmp.le.s32.totalorder 1, %s27
      %p528 = scmp.lt.s32.totalorder %s27, 3
      %p529 = pnand %p527, %p528
      %p530 = pneg %p529
      // Predicated region
      $region69: #{tpu_custom_call.1} parent=5 // pred_check
        _
      $region70: #{tpu_custom_call.1} parent=5 // pred_check_branch
        %532 = sbr.rel (%p529) target = $region72
      $region71: #{tpu_custom_call.1} parent=5 // pred_region
        %s533 = ssub.s32 %s27, 1
        // Predicated region
        $region73: #{tpu_custom_call.1} parent=71 // pred_check
          %p534 = pneg %p48
        $region74: #{tpu_custom_call.1} parent=71 // pred_check_branch
          %536 = sbr.rel (%p534) target = $region76
        $region75: #{tpu_custom_call.1} parent=71 // pred_region
          %538 = dma.done [#allocation3], 256
        $region76: #{tpu_custom_call.1} parent=71 // pred_fallthru
          _
        %s539 = sand.u32 %s32, 1
        %s540 = scalar_lea.sflag [#allocation6], %s539
        %s541 = sand.u32 %s87, 1
        %s542 = scalar_lea.vmem [#allocation5], %s541
        // Predicated region
        $region77: #{tpu_custom_call.1} parent=71 // pred_check
          %p543 = pneg %p100
        $region78: #{tpu_custom_call.1} parent=71 // pred_check_branch
          %545 = sbr.rel (%p543) target = $region80
        $region79: #{tpu_custom_call.1} parent=71 // pred_region
          %547 = dma.done %s540, 16
        $region80: #{tpu_custom_call.1} parent=71 // pred_fallthru
          _
        %s548 = sand.u32 %s32, 1
        %s549 = scalar_lea.sflag [#allocation6], %s548
        %s550 = sand.u32 %s165, 1
        %s551 = scalar_lea.vmem [#allocation7], %s550
        // Predicated region
        $region81: #{tpu_custom_call.1} parent=71 // pred_check
          %p552 = pneg %p178
        $region82: #{tpu_custom_call.1} parent=71 // pred_check_branch
          %554 = sbr.rel (%p552) target = $region84
        $region83: #{tpu_custom_call.1} parent=71 // pred_region
          %556 = dma.done %s549, 16
        $region84: #{tpu_custom_call.1} parent=71 // pred_fallthru
          _
        %s557 = sand.u32 %s321, 1
        %s558 = scalar_lea.sflag [#allocation9], %s557
        %s559 = sand.u32 %s321, 1
        %s560 = scalar_lea.vmem [#allocation8], %s559
        // Predicated region
        $region85: #{tpu_custom_call.1} parent=71 // pred_check
          %p561 = pneg %p334
        $region86: #{tpu_custom_call.1} parent=71 // pred_check_branch
          %563 = sbr.rel (%p561) target = $region88
        $region87: #{tpu_custom_call.1} parent=71 // pred_region
          %565 = dma.done %s558, 16
        $region88: #{tpu_custom_call.1} parent=71 // pred_fallthru
          _
        %p566 = pneg %p48
        %p567 = pneg %p45
        %p568 = scmp.lt.s32.totalorder %s32, 1
        %s569 = scalar_select %p568, %s32, 1
        %s570 = smul.addr %s569, 4
        %s571 = smul.addr %s570, 4
        %s572 = scalar_lea.vmem %s1, %s571
        %p573 = pneg %p74
        %p574 = pneg %p71
        %s575 = sand.u32 %s32, 1
        %s576 = scalar_lea.sflag [#allocation6], %s575
        %s577 = sand.u32 %s87, 1
        %s578 = scalar_lea.vmem [#allocation5], %s577
        %p579 = pneg %p100
        %p580 = pneg %p97
        %p581 = scmp.lt.s32.totalorder %s32, 1
        %s582 = scalar_select %p581, %s32, 1
        %s583 = smul.addr %s582, 4
        %s584 = smul.addr %s583, 4
        %s585 = scalar_lea.vmem %s3, %s584
        %p586 = pneg %p126
        %p587 = pneg %p123
        %p588 = scmp.lt.s32.totalorder %s32, 1
        %s589 = scalar_select %p588, %s32, 1
        %s590 = scalar_lea.vmem %s4, %s589
        %p591 = pneg %p152
        %p592 = pneg %p149
        %s593 = sand.u32 %s32, 1
        %s594 = scalar_lea.sflag [#allocation6], %s593
        %s595 = sand.u32 %s165, 1
        %s596 = scalar_lea.vmem [#allocation7], %s595
        %p597 = pneg %p178
        %p598 = pneg %p175
        %p599 = scmp.lt.s32.totalorder %s32, 1
        %s600 = scalar_select %p599, %s32, 1
        %s601 = scalar_lea.vmem %s6, %s600
        %p602 = pneg %p204
        %p603 = pneg %p201
        %p604 = scmp.lt.s32.totalorder %s32, 1
        %s605 = scalar_select %p604, %s32, 1
        %s606 = smul.addr %s605, 4
        %s607 = smul.addr %s606, 4
        %s608 = scalar_lea.vmem %s7, %s607
        %p609 = pneg %p230
        %p610 = pneg %p227
        %p611 = scmp.lt.s32.totalorder %s32, 1
        %s612 = scalar_select %p611, %s32, 1
        %s613 = scalar_lea.vmem %s8, %s612
        %p614 = pneg %p256
        %p615 = pneg %p253
        %p616 = scmp.lt.s32.totalorder %s32, 1
        %s617 = scalar_select %p616, %s32, 1
        %s618 = smul.addr %s617, 8
        %s619 = smul.addr %s618, 4
        %s620 = scalar_lea.vmem %s9, %s619
        %p621 = pneg %p282
        %p622 = pneg %p279
        %p623 = scmp.lt.s32.totalorder %s32, 1
        %s624 = scalar_select %p623, %s32, 1
        %s625 = scalar_lea.vmem %s10, %s624
        %p626 = pneg %p308
        %p627 = pneg %p305
        %s628 = sand.u32 %s321, 1
        %s629 = scalar_lea.sflag [#allocation9], %s628
        %s630 = sand.u32 %s321, 1
        %s631 = scalar_lea.vmem [#allocation8], %s630
        %p632 = pneg %p334
        %p633 = pneg %p331
        %p634 = scmp.lt.s32.totalorder %s32, 1
        %s635 = scalar_select %p634, %s32, 1
        %s636 = scalar_lea.vmem %s12, %s635
        %p637 = pneg %p360
        %p638 = pneg %p357
        %p639 = pneg %p381
        %p640 = pneg %p378
        %p641 = scmp.lt.s32.totalorder %s32, 1
        %s642 = scalar_select %p641, %s32, 1
        %s643 = smul.addr %s642, 4
        %s644 = smul.addr %s643, 4
        %s645 = scalar_lea.vmem %s1, %s644
        %p646 = scmp.lt.s32.totalorder %s32, 1
        %s647 = scalar_select %p646, %s32, 1
        %s648 = smul.addr %s647, 4
        %s649 = smul.addr %s648, 4
        %s650 = scalar_lea.vmem %s3, %s649
        %p651 = scmp.lt.s32.totalorder %s32, 1
        %s652 = scalar_select %p651, %s32, 1
        %s653 = scalar_lea.vmem %s4, %s652
        %p654 = scmp.lt.s32.totalorder %s32, 1
        %s655 = scalar_select %p654, %s32, 1
        %s656 = scalar_lea.vmem %s6, %s655
        %p657 = scmp.lt.s32.totalorder %s32, 1
        %s658 = scalar_select %p657, %s32, 1
        %s659 = smul.addr %s658, 4
        %s660 = smul.addr %s659, 4
        %s661 = scalar_lea.vmem %s7, %s660
        %p662 = scmp.lt.s32.totalorder %s32, 1
        %s663 = scalar_select %p662, %s32, 1
        %s664 = scalar_lea.vmem %s8, %s663
        %p665 = scmp.lt.s32.totalorder %s32, 1
        %s666 = scalar_select %p665, %s32, 1
        %s667 = smul.addr %s666, 8
        %s668 = smul.addr %s667, 4
        %s669 = scalar_lea.vmem %s9, %s668
        %p670 = scmp.lt.s32.totalorder %s32, 1
        %s671 = scalar_select %p670, %s32, 1
        %s672 = scalar_lea.vmem %s10, %s671
        %p673 = scmp.lt.s32.totalorder %s32, 1
        %s674 = scalar_select %p673, %s32, 1
        %s675 = scalar_lea.vmem %s12, %s674
        %p677 = scmp.eq.s32.totalorder %s32, 0
        // Predicated region
        $region89: #{tpu_custom_call.1} parent=71 // pred_check
          %p678 = pneg %p677
        $region90: #{tpu_custom_call.1} parent=71 // pred_check_branch
          %680 = sbr.rel (%p678) target = $region92
        $region91: #{tpu_custom_call.1} parent=71 // pred_region
          %v681 = vld [vmem:[#allocation2] sm:$0xff]
          %v682 = vld [vmem:[#allocation2 + $0x8] sm:$0xff]
          %vm683 = vcmask 261120
          %684 = vst.msk [vmem:[#allocation10] sm:$0xff] %vm683, %v681
          %685 = vst.msk [vmem:[#allocation10 + $0x8] sm:$0xff] %vm683, %v682
        $region92: #{tpu_custom_call.1} parent=71 // pred_fallthru
          _
        %v686 = vld [vmem:[#allocation10] sm:$0xff]
        %v687 = vld [vmem:[#allocation10 + $0x8] sm:$0xff]
        %v688 = vld [vmem:[%s645] sm:$0xf]
        %v689 = vld [vmem:[%s645 + $0x4] sm:$0xf]
        %v690 = vld [vmem:[%s645 + $0x8] sm:$0xf]
        %v691 = vld [vmem:[%s645 + $0xc] sm:$0xf]
        %v692 = vld [vmem:[%s542] sm:$0x1]
        %v693 = vld [vmem:[%s650] sm:$0xf]
        %v694 = vld [vmem:[%s650 + $0x4] sm:$0xf]
        %v695 = vld [vmem:[%s650 + $0x8] sm:$0xf]
        %v696 = vld [vmem:[%s650 + $0xc] sm:$0xf]
        %v697 = vld [vmem:[%s653] sm:$0x1]
        %v698 = vld [vmem:[%s551] sm:$0x1]
        %v699 = vld [vmem:[%s656] sm:$0x1]
        %v700 = vld [vmem:[%s661] sm:$0xf]
        %v701 = vld [vmem:[%s661 + $0x4] sm:$0xf]
        %v702 = vld [vmem:[%s661 + $0x8] sm:$0xf]
        %v703 = vld [vmem:[%s661 + $0xc] sm:$0xf]
        %v704 = vld [vmem:[%s664] sm:$0x1]
        %v705 = vld [vmem:[%s669] sm:$0xf]
        %v706 = vld [vmem:[%s669 + $0x4] sm:$0xf]
        %v707 = vld [vmem:[%s669 + $0x8] sm:$0xf]
        %v708 = vld [vmem:[%s669 + $0xc] sm:$0xf]
        %v709 = vld [vmem:[%s669 + $0x10] sm:$0xf]
        %v710 = vld [vmem:[%s669 + $0x14] sm:$0xf]
        %v711 = vld [vmem:[%s669 + $0x18] sm:$0xf]
        %v712 = vld [vmem:[%s669 + $0x1c] sm:$0xf]
        %v713 = vld [vmem:[%s672] sm:$0x1]
        %v714 = vld [vmem:[%s560] sm:$0x1]
        %v715 = vld [vmem:[%s675] sm:$0x1]
        %v716 = vpack.c.bf16 %v687, %v686
        %v718 = vperm.slane %v692, 0
        %v724 = vunpack.c.l.b16 %v688
        %v725 = vunpack.c.l.b16 %v689
        %v726 = vunpack.c.l.b16 %v690
        %v727 = vunpack.c.l.b16 %v691
        %v728 = vpack.c.b16 %v725, %v724
        %v729 = vpack.c.b16 %v727, %v726
        %vm732 = vcmask 261120
        %v734 = vsel %vm732, %v716, 0
        %736 = vmatpush.bf16.msra.mxu0 0
        %737 = vmatpush.bf16.msra.mxu0 0
        %738 = vmatpush.bf16.msra.mxu0 0
        %739 = vmatpush.bf16.msra.mxu0 0
        %740 = vmatpush.bf16.msra.mxu0 0
        %741 = vmatpush.bf16.msra.mxu0 0
        %742 = vmatpush.bf16.msra.mxu0 %v729
        %743 = vmatpush.bf16.msra.mxu0 %v728
        %744 = vmatmul.bf16.gmra.mxu0 %v734
        %v745 = vpop.f32.mrf.mxu0
        %v746 = vadd.f32 %v718, %v745
        %v747 = vpop.f32.mrf.mxu0
        %v748 = vadd.f32 %v718, %v747
        %749 = vdwg.mxu0
        %v750 = vlaneseq
        %v751 = vand.u32 %v750, 127
        %v752 = vlaneseq
        %v753 = vshrl.u32 %v752, 7
        %v754 = vmul.u32 %v753, 8
        %vm755 = vcmp.ge.s32.totalorder %v751, %v754
        %v756 = vadd.s32 %v754, 8
        %vm757 = vcmp.lt.s32.totalorder %v751, %v756
        %vm758 = vmand %vm755, %vm757
        %v759 = vsel %vm758, 1, 0
        %v760 = vcvt.s32.f32 %v759
        %v762 = vrot.slane %v760, 1
        %v763 = vrot.slane %v760, 2
        %v764 = vrot.slane %v760, 3
        %v765 = vperm.slane %v760, 0
        %v766 = vperm.slane %v762, 0
        %v767 = vperm.slane %v763, 0
        %v768 = vperm.slane %v764, 0
        %v773 = vmul.f32 %v746, %v765
        %v774 = vmul.f32 %v748, %v765
        %v775 = vmul.f32 %v746, %v766
        %v776 = vmul.f32 %v748, %v766
        %v777 = vmul.f32 %v746, %v767
        %v778 = vmul.f32 %v748, %v767
        %v779 = vmul.f32 %v746, %v768
        %v780 = vmul.f32 %v748, %v768
        %781 = vrot.lane.b32.xlu0 %v765, 64
        %v782 = vpop.permute.xlu0 %781
        %783 = vrot.lane.b32.xlu0 %v766, 64
        %v784 = vpop.permute.xlu0 %783
        %785 = vrot.lane.b32.xlu0 %v767, 64
        %v786 = vpop.permute.xlu0 %785
        %787 = vrot.lane.b32.xlu0 %v768, 64
        %v788 = vpop.permute.xlu0 %787
        %v793 = vmul.f32 %v746, %v782
        %v794 = vmul.f32 %v748, %v782
        %v795 = vmul.f32 %v746, %v784
        %v796 = vmul.f32 %v748, %v784
        %v797 = vmul.f32 %v746, %v786
        %v798 = vmul.f32 %v748, %v786
        %v799 = vmul.f32 %v746, %v788
        %v800 = vmul.f32 %v748, %v788
        %v801 = vpack.c.bf16 %v773, %v773
        %v802 = vpack.c.bf16 %v774, %v774
        %v803 = vpack.c.bf16 %v775, %v775
        %v804 = vpack.c.bf16 %v776, %v776
        %v805 = vpack.c.bf16 %v777, %v777
        %v806 = vpack.c.bf16 %v778, %v778
        %v807 = vpack.c.bf16 %v779, %v779
        %v808 = vpack.c.bf16 %v780, %v780
        %v809 = vpack.c.bf16 %v746, %v746
        %v810 = vpack.c.bf16 %v748, %v748
        %v812 = vunpack.c.l.b16 %v809
        %v813 = vpack.c.b16 %v812, %v812
        %814 = vrot.lane.b32.xlu0 %v813, 96
        %v815 = vpop.permute.xlu0 %814
        %v817 = vsel %vm732, %v801, 0
        %v820 = vsel %vm732, %v815, 0
        %822 = vmatpush.bf16.xpose.msra.mxu0 0
        %823 = vmatpush.bf16.xpose.msra.mxu0 0
        %824 = vmatpush.bf16.xpose.msra.mxu0 0
        %825 = vmatpush.bf16.xpose.msra.mxu0 0
        %826 = vmatpush.bf16.xpose.msra.mxu0 0
        %827 = vmatpush.bf16.xpose.msra.mxu0 0
        %828 = vmatpush.bf16.xpose.msra.mxu0 0
        %829 = vmatpush.bf16.xpose.msra.mxu0 %v820
        %830 = vmatmul.bf16.gmra.mxu0 %v817
        %v831 = vpop.f32.mrf.mxu0
        %v832 = vadd.f32 0.0, %v831
        %v833 = vpop.f32.mrf.mxu0
        %834 = vdwg.mxu0
        %v836 = vunpack.c.l.b16 %v810
        %v837 = vpack.c.b16 %v836, %v836
        %838 = vrot.lane.b32.xlu0 %v837, 96
        %v839 = vpop.permute.xlu0 %838
        %v841 = vsel %vm732, %v802, 0
        %v844 = vsel %vm732, %v839, 0
        %846 = vmatpush.bf16.xpose.msra.mxu0 0
        %847 = vmatpush.bf16.xpose.msra.mxu0 0
        %848 = vmatpush.bf16.xpose.msra.mxu0 0
        %849 = vmatpush.bf16.xpose.msra.mxu0 0
        %850 = vmatpush.bf16.xpose.msra.mxu0 0
        %851 = vmatpush.bf16.xpose.msra.mxu0 0
        %852 = vmatpush.bf16.xpose.msra.mxu0 0
        %853 = vmatpush.bf16.xpose.msra.mxu0 %v844
        %854 = vmatmul.bf16.gmra.mxu0 %v841
        %v855 = vpop.f32.mrf.mxu0
        %v856 = vadd.f32 0.0, %v855
        %v857 = vpop.f32.mrf.mxu0
        %858 = vdwg.mxu0
        %v860 = vsel %vm732, %v803, 0
        %862 = vmatpush.bf16.xpose.msra.mxu0 0
        %863 = vmatpush.bf16.xpose.msra.mxu0 0
        %864 = vmatpush.bf16.xpose.msra.mxu0 0
        %865 = vmatpush.bf16.xpose.msra.mxu0 0
        %866 = vmatpush.bf16.xpose.msra.mxu0 0
        %867 = vmatpush.bf16.xpose.msra.mxu0 0
        %868 = vmatpush.bf16.xpose.msra.mxu0 0
        %869 = vmatpush.bf16.xpose.msra.mxu0 %v820
        %870 = vmatmul.bf16.gmra.mxu0 %v860
        %v871 = vpop.f32.mrf.mxu0
        %v872 = vadd.f32 0.0, %v871
        %v873 = vpop.f32.mrf.mxu0
        %874 = vdwg.mxu0
        %v876 = vsel %vm732, %v804, 0
        %878 = vmatpush.bf16.xpose.msra.mxu0 0
        %879 = vmatpush.bf16.xpose.msra.mxu0 0
        %880 = vmatpush.bf16.xpose.msra.mxu0 0
        %881 = vmatpush.bf16.xpose.msra.mxu0 0
        %882 = vmatpush.bf16.xpose.msra.mxu0 0
        %883 = vmatpush.bf16.xpose.msra.mxu0 0
        %884 = vmatpush.bf16.xpose.msra.mxu0 0
        %885 = vmatpush.bf16.xpose.msra.mxu0 %v844
        %886 = vmatmul.bf16.gmra.mxu0 %v876
        %v887 = vpop.f32.mrf.mxu0
        %v888 = vadd.f32 0.0, %v887
        %v889 = vpop.f32.mrf.mxu0
        %890 = vdwg.mxu0
        %v892 = vsel %vm732, %v805, 0
        %894 = vmatpush.bf16.xpose.msra.mxu0 0
        %895 = vmatpush.bf16.xpose.msra.mxu0 0
        %896 = vmatpush.bf16.xpose.msra.mxu0 0
        %897 = vmatpush.bf16.xpose.msra.mxu0 0
        %898 = vmatpush.bf16.xpose.msra.mxu0 0
        %899 = vmatpush.bf16.xpose.msra.mxu0 0
        %900 = vmatpush.bf16.xpose.msra.mxu0 0
        %901 = vmatpush.bf16.xpose.msra.mxu0 %v820
        %902 = vmatmul.bf16.gmra.mxu0 %v892
        %v903 = vpop.f32.mrf.mxu0
        %v904 = vadd.f32 0.0, %v903
        %v905 = vpop.f32.mrf.mxu0
        %906 = vdwg.mxu0
        %v908 = vsel %vm732, %v806, 0
        %910 = vmatpush.bf16.xpose.msra.mxu0 0
        %911 = vmatpush.bf16.xpose.msra.mxu0 0
        %912 = vmatpush.bf16.xpose.msra.mxu0 0
        %913 = vmatpush.bf16.xpose.msra.mxu0 0
        %914 = vmatpush.bf16.xpose.msra.mxu0 0
        %915 = vmatpush.bf16.xpose.msra.mxu0 0
        %916 = vmatpush.bf16.xpose.msra.mxu0 0
        %917 = vmatpush.bf16.xpose.msra.mxu0 %v844
        %918 = vmatmul.bf16.gmra.mxu0 %v908
        %v919 = vpop.f32.mrf.mxu0
        %v920 = vadd.f32 0.0, %v919
        %v921 = vpop.f32.mrf.mxu0
        %922 = vdwg.mxu0
        %v924 = vsel %vm732, %v807, 0
        %926 = vmatpush.bf16.xpose.msra.mxu0 0
        %927 = vmatpush.bf16.xpose.msra.mxu0 0
        %928 = vmatpush.bf16.xpose.msra.mxu0 0
        %929 = vmatpush.bf16.xpose.msra.mxu0 0
        %930 = vmatpush.bf16.xpose.msra.mxu0 0
        %931 = vmatpush.bf16.xpose.msra.mxu0 0
        %932 = vmatpush.bf16.xpose.msra.mxu0 0
        %933 = vmatpush.bf16.xpose.msra.mxu0 %v820
        %934 = vmatmul.bf16.gmra.mxu0 %v924
        %v935 = vpop.f32.mrf.mxu0
        %v936 = vadd.f32 0.0, %v935
        %v937 = vpop.f32.mrf.mxu0
        %938 = vdwg.mxu0
        %v940 = vsel %vm732, %v808, 0
        %942 = vmatpush.bf16.xpose.msra.mxu0 0
        %943 = vmatpush.bf16.xpose.msra.mxu0 0
        %944 = vmatpush.bf16.xpose.msra.mxu0 0
        %945 = vmatpush.bf16.xpose.msra.mxu0 0
        %946 = vmatpush.bf16.xpose.msra.mxu0 0
        %947 = vmatpush.bf16.xpose.msra.mxu0 0
        %948 = vmatpush.bf16.xpose.msra.mxu0 0
        %949 = vmatpush.bf16.xpose.msra.mxu0 %v844
        %950 = vmatmul.bf16.gmra.mxu0 %v940
        %v951 = vpop.f32.mrf.mxu0
        %v952 = vadd.f32 0.0, %v951
        %v953 = vpop.f32.mrf.mxu0
        %954 = vdwg.mxu0
        %v955 = vmul.f32 %v832, 0.35355338
        %v956 = vmul.f32 %v856, 0.35355338
        %v957 = vmul.f32 %v872, 0.35355338
        %v958 = vmul.f32 %v888, 0.35355338
        %v959 = vmul.f32 %v904, 0.35355338
        %v960 = vmul.f32 %v920, 0.35355338
        %v961 = vmul.f32 %v936, 0.35355338
        %v962 = vmul.f32 %v952, 0.35355338
        %vm963 = vcmask 64512
        %v964 = vsel %vm963, %v955, -inf
        %965 = vmax.xlane.f32.xlu0 %v964
        %v966 = vpop.xlane.xlu0 %965
        %v967 = vsel %vm963, %v956, -inf
        %968 = vmax.xlane.f32.xlu0 %v967
        %v969 = vpop.xlane.xlu0 %968
        %v970 = vsel %vm963, %v957, -inf
        %971 = vmax.xlane.f32.xlu0 %v970
        %v972 = vpop.xlane.xlu0 %971
        %v973 = vsel %vm963, %v958, -inf
        %974 = vmax.xlane.f32.xlu0 %v973
        %v975 = vpop.xlane.xlu0 %974
        %v976 = vsel %vm963, %v959, -inf
        %977 = vmax.xlane.f32.xlu0 %v976
        %v978 = vpop.xlane.xlu0 %977
        %v979 = vsel %vm963, %v960, -inf
        %980 = vmax.xlane.f32.xlu0 %v979
        %v981 = vpop.xlane.xlu0 %980
        %v982 = vsel %vm963, %v961, -inf
        %983 = vmax.xlane.f32.xlu0 %v982
        %v984 = vpop.xlane.xlu0 %983
        %v985 = vsel %vm963, %v962, -inf
        %986 = vmax.xlane.f32.xlu0 %v985
        %v987 = vpop.xlane.xlu0 %986
        %v988 = vsub.f32 %v955, %v966
        %v989 = vsub.f32 %v956, %v969
        %v990 = vsub.f32 %v957, %v972
        %v991 = vsub.f32 %v958, %v975
        %v992 = vsub.f32 %v959, %v978
        %v993 = vsub.f32 %v960, %v981
        %v994 = vsub.f32 %v961, %v984
        %v995 = vsub.f32 %v962, %v987
        %v996 = vmul.f32 %v988, 1.442695
        %v997 = vpow.pop %v996
        %v998 = vmul.f32 %v989, 1.442695
        %v999 = vpow.pop %v998
        %v1000 = vmul.f32 %v990, 1.442695
        %v1001 = vpow.pop %v1000
        %v1002 = vmul.f32 %v991, 1.442695
        %v1003 = vpow.pop %v1002
        %v1004 = vmul.f32 %v992, 1.442695
        %v1005 = vpow.pop %v1004
        %v1006 = vmul.f32 %v993, 1.442695
        %v1007 = vpow.pop %v1006
        %v1008 = vmul.f32 %v994, 1.442695
        %v1009 = vpow.pop %v1008
        %v1010 = vmul.f32 %v995, 1.442695
        %v1011 = vpow.pop %v1010
        %v1012 = vsel %vm963, %v997, 0.0
        %1013 = vadd.xlane.f32.xlu0 %v1012
        %v1014 = vpop.xlane.xlu0 %1013
        %v1015 = vsel %vm963, %v999, 0.0
        %1016 = vadd.xlane.f32.xlu0 %v1015
        %v1017 = vpop.xlane.xlu0 %1016
        %v1018 = vsel %vm963, %v1001, 0.0
        %1019 = vadd.xlane.f32.xlu0 %v1018
        %v1020 = vpop.xlane.xlu0 %1019
        %v1021 = vsel %vm963, %v1003, 0.0
        %1022 = vadd.xlane.f32.xlu0 %v1021
        %v1023 = vpop.xlane.xlu0 %1022
        %v1024 = vsel %vm963, %v1005, 0.0
        %1025 = vadd.xlane.f32.xlu0 %v1024
        %v1026 = vpop.xlane.xlu0 %1025
        %v1027 = vsel %vm963, %v1007, 0.0
        %1028 = vadd.xlane.f32.xlu0 %v1027
        %v1029 = vpop.xlane.xlu0 %1028
        %v1030 = vsel %vm963, %v1009, 0.0
        %1031 = vadd.xlane.f32.xlu0 %v1030
        %v1032 = vpop.xlane.xlu0 %1031
        %v1033 = vsel %vm963, %v1011, 0.0
        %1034 = vadd.xlane.f32.xlu0 %v1033
        %v1035 = vpop.xlane.xlu0 %1034
        %v1036 = vrcp.pop %v1014
        %v1037 = vrcp.pop %v1017
        %v1038 = vrcp.pop %v1020
        %v1039 = vrcp.pop %v1023
        %v1040 = vrcp.pop %v1026
        %v1041 = vrcp.pop %v1029
        %v1042 = vrcp.pop %v1032
        %v1043 = vrcp.pop %v1035
        %v1044 = vmul.f32 %v997, %v1036
        %v1045 = vmul.f32 %v999, %v1037
        %v1046 = vmul.f32 %v1001, %v1038
        %v1047 = vmul.f32 %v1003, %v1039
        %v1048 = vmul.f32 %v1005, %v1040
        %v1049 = vmul.f32 %v1007, %v1041
        %v1050 = vmul.f32 %v1009, %v1042
        %v1051 = vmul.f32 %v1011, %v1043
        %v1052 = vpack.c.bf16 %v1044, %v1044
        %v1053 = vpack.c.bf16 %v1045, %v1045
        %v1054 = vpack.c.bf16 %v1046, %v1046
        %v1055 = vpack.c.bf16 %v1047, %v1047
        %v1056 = vpack.c.bf16 %v1048, %v1048
        %v1057 = vpack.c.bf16 %v1049, %v1049
        %v1058 = vpack.c.bf16 %v1050, %v1050
        %v1059 = vpack.c.bf16 %v1051, %v1051
        %v1060 = vpack.c.bf16 %v793, %v793
        %v1061 = vpack.c.bf16 %v794, %v794
        %v1062 = vpack.c.bf16 %v795, %v795
        %v1063 = vpack.c.bf16 %v796, %v796
        %v1064 = vpack.c.bf16 %v797, %v797
        %v1065 = vpack.c.bf16 %v798, %v798
        %v1066 = vpack.c.bf16 %v799, %v799
        %v1067 = vpack.c.bf16 %v800, %v800
        %v1069 = vunpack.c.l.b16 %v1060
        %v1070 = vpack.c.b16 %v1069, %v1069
        %1071 = vrot.lane.b32.xlu0 %v1070, 64
        %v1072 = vpop.permute.xlu0 %1071
        %v1074 = vsel %vm963, %v1052, 0
        %vm1076 = vcmask 1043456
        %v1078 = vsel %vm1076, %v1072, 0
        %1080 = vmatpush.bf16.msra.mxu0 0
        %1081 = vmatpush.bf16.msra.mxu0 0
        %1082 = vmatpush.bf16.msra.mxu0 0
        %1083 = vmatpush.bf16.msra.mxu0 0
        %1084 = vmatpush.bf16.msra.mxu0 0
        %1085 = vmatpush.bf16.msra.mxu0 0
        %1086 = vmatpush.bf16.msra.mxu0 0
        %1087 = vmatpush.bf16.msra.mxu0 %v1078
        %1088 = vmatmul.bf16.gmra.mxu0 %v1074
        %v1089 = vpop.f32.mrf.mxu0
        %v1090 = vadd.f32 0.0, %v1089
        %v1091 = vpop.f32.mrf.mxu0
        %1092 = vdwg.mxu0
        %v1094 = vunpack.c.l.b16 %v1061
        %v1095 = vpack.c.b16 %v1094, %v1094
        %1096 = vrot.lane.b32.xlu0 %v1095, 64
        %v1097 = vpop.permute.xlu0 %1096
        %v1099 = vsel %vm963, %v1053, 0
        %v1102 = vsel %vm1076, %v1097, 0
        %1104 = vmatpush.bf16.msra.mxu0 0
        %1105 = vmatpush.bf16.msra.mxu0 0
        %1106 = vmatpush.bf16.msra.mxu0 0
        %1107 = vmatpush.bf16.msra.mxu0 0
        %1108 = vmatpush.bf16.msra.mxu0 0
        %1109 = vmatpush.bf16.msra.mxu0 0
        %1110 = vmatpush.bf16.msra.mxu0 0
        %1111 = vmatpush.bf16.msra.mxu0 %v1102
        %1112 = vmatmul.bf16.gmra.mxu0 %v1099
        %v1113 = vpop.f32.mrf.mxu0
        %v1114 = vadd.f32 0.0, %v1113
        %v1115 = vpop.f32.mrf.mxu0
        %1116 = vdwg.mxu0
        %v1118 = vunpack.c.l.b16 %v1062
        %v1119 = vpack.c.b16 %v1118, %v1118
        %1120 = vrot.lane.b32.xlu0 %v1119, 64
        %v1121 = vpop.permute.xlu0 %1120
        %v1123 = vsel %vm963, %v1054, 0
        %v1126 = vsel %vm1076, %v1121, 0
        %1128 = vmatpush.bf16.msra.mxu0 0
        %1129 = vmatpush.bf16.msra.mxu0 0
        %1130 = vmatpush.bf16.msra.mxu0 0
        %1131 = vmatpush.bf16.msra.mxu0 0
        %1132 = vmatpush.bf16.msra.mxu0 0
        %1133 = vmatpush.bf16.msra.mxu0 0
        %1134 = vmatpush.bf16.msra.mxu0 0
        %1135 = vmatpush.bf16.msra.mxu0 %v1126
        %1136 = vmatmul.bf16.gmra.mxu0 %v1123
        %v1137 = vpop.f32.mrf.mxu0
        %v1138 = vadd.f32 0.0, %v1137
        %v1139 = vpop.f32.mrf.mxu0
        %1140 = vdwg.mxu0
        %v1142 = vunpack.c.l.b16 %v1063
        %v1143 = vpack.c.b16 %v1142, %v1142
        %1144 = vrot.lane.b32.xlu0 %v1143, 64
        %v1145 = vpop.permute.xlu0 %1144
        %v1147 = vsel %vm963, %v1055, 0
        %v1150 = vsel %vm1076, %v1145, 0
        %1152 = vmatpush.bf16.msra.mxu0 0
        %1153 = vmatpush.bf16.msra.mxu0 0
        %1154 = vmatpush.bf16.msra.mxu0 0
        %1155 = vmatpush.bf16.msra.mxu0 0
        %1156 = vmatpush.bf16.msra.mxu0 0
        %1157 = vmatpush.bf16.msra.mxu0 0
        %1158 = vmatpush.bf16.msra.mxu0 0
        %1159 = vmatpush.bf16.msra.mxu0 %v1150
        %1160 = vmatmul.bf16.gmra.mxu0 %v1147
        %v1161 = vpop.f32.mrf.mxu0
        %v1162 = vadd.f32 0.0, %v1161
        %v1163 = vpop.f32.mrf.mxu0
        %1164 = vdwg.mxu0
        %v1166 = vunpack.c.l.b16 %v1064
        %v1167 = vpack.c.b16 %v1166, %v1166
        %1168 = vrot.lane.b32.xlu0 %v1167, 64
        %v1169 = vpop.permute.xlu0 %1168
        %v1171 = vsel %vm963, %v1056, 0
        %v1174 = vsel %vm1076, %v1169, 0
        %1176 = vmatpush.bf16.msra.mxu0 0
        %1177 = vmatpush.bf16.msra.mxu0 0
        %1178 = vmatpush.bf16.msra.mxu0 0
        %1179 = vmatpush.bf16.msra.mxu0 0
        %1180 = vmatpush.bf16.msra.mxu0 0
        %1181 = vmatpush.bf16.msra.mxu0 0
        %1182 = vmatpush.bf16.msra.mxu0 0
        %1183 = vmatpush.bf16.msra.mxu0 %v1174
        %1184 = vmatmul.bf16.gmra.mxu0 %v1171
        %v1185 = vpop.f32.mrf.mxu0
        %v1186 = vadd.f32 0.0, %v1185
        %v1187 = vpop.f32.mrf.mxu0
        %1188 = vdwg.mxu0
        %v1190 = vunpack.c.l.b16 %v1065
        %v1191 = vpack.c.b16 %v1190, %v1190
        %1192 = vrot.lane.b32.xlu0 %v1191, 64
        %v1193 = vpop.permute.xlu0 %1192
        %v1195 = vsel %vm963, %v1057, 0
        %v1198 = vsel %vm1076, %v1193, 0
        %1200 = vmatpush.bf16.msra.mxu0 0
        %1201 = vmatpush.bf16.msra.mxu0 0
        %1202 = vmatpush.bf16.msra.mxu0 0
        %1203 = vmatpush.bf16.msra.mxu0 0
        %1204 = vmatpush.bf16.msra.mxu0 0
        %1205 = vmatpush.bf16.msra.mxu0 0
        %1206 = vmatpush.bf16.msra.mxu0 0
        %1207 = vmatpush.bf16.msra.mxu0 %v1198
        %1208 = vmatmul.bf16.gmra.mxu0 %v1195
        %v1209 = vpop.f32.mrf.mxu0
        %v1210 = vadd.f32 0.0, %v1209
        %v1211 = vpop.f32.mrf.mxu0
        %1212 = vdwg.mxu0
        %v1214 = vunpack.c.l.b16 %v1066
        %v1215 = vpack.c.b16 %v1214, %v1214
        %1216 = vrot.lane.b32.xlu0 %v1215, 64
        %v1217 = vpop.permute.xlu0 %1216
        %v1219 = vsel %vm963, %v1058, 0
        %v1222 = vsel %vm1076, %v1217, 0
        %1224 = vmatpush.bf16.msra.mxu0 0
        %1225 = vmatpush.bf16.msra.mxu0 0
        %1226 = vmatpush.bf16.msra.mxu0 0
        %1227 = vmatpush.bf16.msra.mxu0 0
        %1228 = vmatpush.bf16.msra.mxu0 0
        %1229 = vmatpush.bf16.msra.mxu0 0
        %1230 = vmatpush.bf16.msra.mxu0 0
        %1231 = vmatpush.bf16.msra.mxu0 %v1222
        %1232 = vmatmul.bf16.gmra.mxu0 %v1219
        %v1233 = vpop.f32.mrf.mxu0
        %v1234 = vadd.f32 0.0, %v1233
        %v1235 = vpop.f32.mrf.mxu0
        %1236 = vdwg.mxu0
        %v1238 = vunpack.c.l.b16 %v1067
        %v1239 = vpack.c.b16 %v1238, %v1238
        %1240 = vrot.lane.b32.xlu0 %v1239, 64
        %v1241 = vpop.permute.xlu0 %1240
        %v1243 = vsel %vm963, %v1059, 0
        %v1246 = vsel %vm1076, %v1241, 0
        %1248 = vmatpush.bf16.msra.mxu0 0
        %1249 = vmatpush.bf16.msra.mxu0 0
        %1250 = vmatpush.bf16.msra.mxu0 0
        %1251 = vmatpush.bf16.msra.mxu0 0
        %1252 = vmatpush.bf16.msra.mxu0 0
        %1253 = vmatpush.bf16.msra.mxu0 0
        %1254 = vmatpush.bf16.msra.mxu0 0
        %1255 = vmatpush.bf16.msra.mxu0 %v1246
        %1256 = vmatmul.bf16.gmra.mxu0 %v1243
        %v1257 = vpop.f32.mrf.mxu0
        %v1258 = vadd.f32 0.0, %v1257
        %v1259 = vpop.f32.mrf.mxu0
        %1260 = vdwg.mxu0
        %v1261 = vsel %vm732, %v1090, 0.0
        %v1262 = vsel %vm732, %v1138, 0.0
        %v1263 = vadd.f32 %v1261, %v1262
        %v1264 = vsel %vm732, %v1186, 0.0
        %v1265 = vadd.f32 %v1263, %v1264
        %v1266 = vsel %vm732, %v1234, 0.0
        %v1267 = vadd.f32 %v1265, %v1266
        %v1268 = vsel %vm732, %v1114, 0.0
        %v1269 = vsel %vm732, %v1162, 0.0
        %v1270 = vadd.f32 %v1268, %v1269
        %v1271 = vsel %vm732, %v1210, 0.0
        %v1272 = vadd.f32 %v1270, %v1271
        %v1273 = vsel %vm732, %v1258, 0.0
        %v1274 = vadd.f32 %v1272, %v1273
        %v1275 = vpack.c.bf16 %v1274, %v1267
        %v1277 = vperm.slane %v697, 0
        %v1283 = vunpack.c.l.b16 %v693
        %v1284 = vunpack.c.l.b16 %v694
        %v1285 = vunpack.c.l.b16 %v695
        %v1286 = vunpack.c.l.b16 %v696
        %v1287 = vpack.c.b16 %v1284, %v1283
        %v1288 = vpack.c.b16 %v1286, %v1285
        %v1292 = vsel %vm732, %v1275, 0
        %1294 = vmatpush.bf16.msra.mxu0 0
        %1295 = vmatpush.bf16.msra.mxu0 0
        %1296 = vmatpush.bf16.msra.mxu0 0
        %1297 = vmatpush.bf16.msra.mxu0 0
        %1298 = vmatpush.bf16.msra.mxu0 0
        %1299 = vmatpush.bf16.msra.mxu0 0
        %1300 = vmatpush.bf16.msra.mxu0 %v1288
        %1301 = vmatpush.bf16.msra.mxu0 %v1287
        %1302 = vmatmul.bf16.gmra.mxu0 %v1292
        %v1303 = vpop.f32.mrf.mxu0
        %v1304 = vadd.f32 %v1277, %v1303
        %v1305 = vpop.f32.mrf.mxu0
        %v1306 = vadd.f32 %v1277, %v1305
        %1307 = vdwg.mxu0
        %v1308 = vadd.f32 %v686, %v1304
        %v1309 = vadd.f32 %v687, %v1306
        %v1310 = vsel %vm732, %v1308, 0.0
        %v1311 = vsel %vm732, %v1309, 0.0
        %v1312 = vadd.f32 %v1310, %v1311
        %v1313 = vrot.slane %v1312, 4
        %v1314 = vadd.f32 %v1312, %v1313
        %v1315 = vrot.slane %v1314, 2
        %v1316 = vadd.f32 %v1314, %v1315
        %v1317 = vrot.slane %v1316, 1
        %v1318 = vadd.f32 %v1316, %v1317
        %v1319 = vrcp.pop 16.0
        %v1320 = vmul.f32 16.0, %v1319
        %v1321 = vsub.f32 1.0, %v1320
        %v1322 = vmul.f32 %v1319, %v1321
        %v1323 = vadd.f32 %v1319, %v1322
        %vm1324 = vweird.f32 %v1319
        %v1325 = vsel %vm1324, %v1319, %v1323
        %v1326 = vmul.f32 %v1318, %v1325
        %v1327 = vsub.f32 %v1308, %v1326
        %v1328 = vsub.f32 %v1309, %v1326
        %v1329 = vmul.f32 %v1327, %v1327
        %v1330 = vmul.f32 %v1328, %v1328
        %v1331 = vsel %vm732, %v1329, 0.0
        %v1332 = vsel %vm732, %v1330, 0.0
        %v1333 = vadd.f32 %v1331, %v1332
        %v1334 = vrot.slane %v1333, 4
        %v1335 = vadd.f32 %v1333, %v1334
        %v1336 = vrot.slane %v1335, 2
        %v1337 = vadd.f32 %v1335, %v1336
        %v1338 = vrot.slane %v1337, 1
        %v1339 = vadd.f32 %v1337, %v1338
        %v1340 = vmul.f32 %v1339, %v1325
        %v1341 = vadd.f32 %v1340, 1e-05
        %v1342 = vrsqrt.pop %v1341
        %v1343 = vmul.f32 %v1342, %v1341
        %v1344 = vmul.f32 %v1343, %v1342
        %v1345 = vmul.f32 0.5, %v1344
        %v1346 = vsub.f32 1.5, %v1345
        %v1347 = vmul.f32 %v1342, %v1346
        %vm1348 = vweird.f32 %v1341
        %vm1349 = vweird.f32 %v1342
        %vm1350 = vmor %vm1348, %vm1349
        %v1351 = vsel %vm1350, %v1342, %v1347
        %v1352 = vmul.f32 %v1327, %v1351
        %v1353 = vmul.f32 %v1328, %v1351
        %v1355 = vperm.slane %v698, 0
        %v1357 = vmul.f32 %v1352, %v1355
        %v1358 = vmul.f32 %v1353, %v1355
        %v1360 = vperm.slane %v699, 0
        %v1362 = vadd.f32 %v1357, %v1360
        %v1363 = vadd.f32 %v1358, %v1360
        %v1364 = vpack.c.bf16 %v1363, %v1362
        %v1366 = vperm.slane %v704, 0
        %v1372 = vunpack.c.l.b16 %v700
        %v1373 = vunpack.c.l.b16 %v701
        %v1374 = vunpack.c.l.b16 %v702
        %v1375 = vunpack.c.l.b16 %v703
        %v1376 = vpack.c.b16 %v1373, %v1372
        %v1377 = vpack.c.b16 %v1375, %v1374
        %v1381 = vsel %vm732, %v1364, 0
        %1383 = vmatpush.bf16.msra.mxu0 0
        %1384 = vmatpush.bf16.msra.mxu0 0
        %1385 = vmatpush.bf16.msra.mxu0 0
        %1386 = vmatpush.bf16.msra.mxu0 0
        %1387 = vmatpush.bf16.msra.mxu0 0
        %1388 = vmatpush.bf16.msra.mxu0 0
        %1389 = vmatpush.bf16.msra.mxu0 %v1377
        %1390 = vmatpush.bf16.msra.mxu0 %v1376
        %1391 = vmatmul.bf16.gmra.mxu0 %v1381
        %v1392 = vpop.f32.mrf.mxu0
        %v1393 = vadd.f32 %v1366, %v1392
        %v1394 = vpop.f32.mrf.mxu0
        %v1395 = vadd.f32 %v1366, %v1394
        %1396 = vdwg.mxu0
        %v1397 = vmul.f32 %v1393, 0.5
        %v1398 = vmul.f32 %v1395, 0.5
        %v1399 = vmul.f32 %v1393, %v1393
        %v1400 = vmul.f32 %v1395, %v1395
        %v1401 = vmul.f32 %v1399, %v1393
        %v1402 = vmul.f32 %v1400, %v1395
        %v1403 = vmul.f32 %v1401, 0.044715
        %v1404 = vmul.f32 %v1402, 0.044715
        %v1405 = vadd.f32 %v1393, %v1403
        %v1406 = vadd.f32 %v1395, %v1404
        %v1407 = vmul.f32 %v1405, 0.7978846
        %v1408 = vmul.f32 %v1406, 0.7978846
        %v1409 = vtanh.pop %v1407
        %v1410 = vtanh.pop %v1408
        %v1411 = vadd.f32 %v1409, 1.0
        %v1412 = vadd.f32 %v1410, 1.0
        %v1413 = vmul.f32 %v1397, %v1411
        %v1414 = vmul.f32 %v1398, %v1412
        %v1415 = vpack.c.bf16 %v1414, %v1413
        %v1417 = vperm.slane %v713, 0
        %v1427 = vunpack.c.l.b16 %v705
        %v1428 = vunpack.c.l.b16 %v706
        %v1429 = vunpack.c.l.b16 %v707
        %v1430 = vunpack.c.l.b16 %v708
        %v1431 = vunpack.c.l.b16 %v709
        %v1432 = vunpack.c.l.b16 %v710
        %v1433 = vunpack.c.l.b16 %v711
        %v1434 = vunpack.c.l.b16 %v712
        %v1435 = vpack.c.b16 %v1428, %v1427
        %v1436 = vpack.c.b16 %v1430, %v1429
        %v1437 = vpack.c.b16 %v1432, %v1431
        %v1438 = vpack.c.b16 %v1434, %v1433
        %vm1443 = vcmask 523264
        %v1445 = vsel %vm1443, %v1415, 0
        %1447 = vmatpush.bf16.msra.mxu0 0
        %1448 = vmatpush.bf16.msra.mxu0 0
        %1449 = vmatpush.bf16.msra.mxu0 0
        %1450 = vmatpush.bf16.msra.mxu0 0
        %1451 = vmatpush.bf16.msra.mxu0 %v1438
        %1452 = vmatpush.bf16.msra.mxu0 %v1437
        %1453 = vmatpush.bf16.msra.mxu0 %v1436
        %1454 = vmatpush.bf16.msra.mxu0 %v1435
        %1455 = vmatmul.bf16.gmra.mxu0 %v1445
        %v1456 = vpop.f32.mrf.mxu0
        %v1457 = vadd.f32 %v1417, %v1456
        %v1458 = vpop.f32.mrf.mxu0
        %v1459 = vadd.f32 %v1417, %v1458
        %1460 = vdwg.mxu0
        %v1461 = vadd.f32 %v1362, %v1457
        %v1462 = vadd.f32 %v1363, %v1459
        %v1463 = vsel %vm732, %v1461, 0.0
        %v1464 = vsel %vm732, %v1462, 0.0
        %v1465 = vadd.f32 %v1463, %v1464
        %v1466 = vrot.slane %v1465, 4
        %v1467 = vadd.f32 %v1465, %v1466
        %v1468 = vrot.slane %v1467, 2
        %v1469 = vadd.f32 %v1467, %v1468
        %v1470 = vrot.slane %v1469, 1
        %v1471 = vadd.f32 %v1469, %v1470
        %v1472 = vmul.f32 %v1471, %v1325
        %v1473 = vsub.f32 %v1461, %v1472
        %v1474 = vsub.f32 %v1462, %v1472
        %v1475 = vmul.f32 %v1473, %v1473
        %v1476 = vmul.f32 %v1474, %v1474
        %v1477 = vsel %vm732, %v1475, 0.0
        %v1478 = vsel %vm732, %v1476, 0.0
        %v1479 = vadd.f32 %v1477, %v1478
        %v1480 = vrot.slane %v1479, 4
        %v1481 = vadd.f32 %v1479, %v1480
        %v1482 = vrot.slane %v1481, 2
        %v1483 = vadd.f32 %v1481, %v1482
        %v1484 = vrot.slane %v1483, 1
        %v1485 = vadd.f32 %v1483, %v1484
        %v1486 = vmul.f32 %v1485, %v1325
        %v1487 = vadd.f32 %v1486, 1e-05
        %v1488 = vrsqrt.pop %v1487
        %v1489 = vmul.f32 %v1488, %v1487
        %v1490 = vmul.f32 %v1489, %v1488
        %v1491 = vmul.f32 0.5, %v1490
        %v1492 = vsub.f32 1.5, %v1491
        %v1493 = vmul.f32 %v1488, %v1492
        %vm1494 = vweird.f32 %v1487
        %vm1495 = vweird.f32 %v1488
        %vm1496 = vmor %vm1494, %vm1495
        %v1497 = vsel %vm1496, %v1488, %v1493
        %v1498 = vmul.f32 %v1473, %v1497
        %v1499 = vmul.f32 %v1474, %v1497
        %v1501 = vperm.slane %v714, 0
        %v1503 = vmul.f32 %v1498, %v1501
        %v1504 = vmul.f32 %v1499, %v1501
        %v1506 = vperm.slane %v715, 0
        %v1508 = vadd.f32 %v1503, %v1506
        %v1509 = vadd.f32 %v1504, %v1506
        %1510 = vst.msk [vmem:[#allocation10] sm:$0xff] %vm732, %v1508
        %1511 = vst.msk [vmem:[#allocation10 + $0x8] sm:$0xff] %vm732, %v1509
        // Predicated region
        $region93: #{tpu_custom_call.1} parent=71 // pred_check
          %p1512 = pneg %p378
        $region94: #{tpu_custom_call.1} parent=71 // pred_check_branch
          %1514 = sbr.rel (%p1512) target = $region96
        $region95: #{tpu_custom_call.1} parent=71 // pred_region
          %1516 = vsyncadd [#allocation4], 0
          %s1517 = sshll.u32 [#allocation10], 4
          %s1518 = int_to_ptr.vmem [resolvable:$true] %s1517
          %s1519 = sshll.u32 %s13, 4
          %s1520 = int_to_ptr.hbm [resolvable:$true] %s1519
          %1525 = dma.vmem_to_hbm [thread:$0]  %s1518, 256, %s1520, [#allocation4], 128, 128, 8
        $region96: #{tpu_custom_call.1} parent=71 // pred_fallthru
          _
        // Predicated region
        $region97: #{tpu_custom_call.1} parent=71 // pred_check
          %p1526 = pneg %p378
        $region98: #{tpu_custom_call.1} parent=71 // pred_check_branch
          %1528 = sbr.rel (%p1526) target = $region100
        $region99: #{tpu_custom_call.1} parent=71 // pred_region
          %1530 = dma.done [#allocation4], 256
        $region100: #{tpu_custom_call.1} parent=71 // pred_fallthru
          _
      $region72: #{tpu_custom_call.1} parent=5 // pred_fallthru
        _
      %p1531 = scmp.le.s32.totalorder 2, %s27
      // Predicated region
      $region101: #{tpu_custom_call.1} parent=5 // pred_check
        %p1532 = pneg %p1531
      $region102: #{tpu_custom_call.1} parent=5 // pred_check_branch
        %1534 = sbr.rel (%p1532) target = $region104
      $region103: #{tpu_custom_call.1} parent=5 // pred_region
        %s1535 = ssub.s32 %s27, 2
      $region104: #{tpu_custom_call.1} parent=5 // pred_fallthru
        _
    $region6: #{tpu_custom_call.1} parent=1 // loop_footer
      %s31 = sadd.s32 1, %s27
    $region7: #{tpu_custom_call.1} parent=1 // loop_footer_branch
      %26 = sbr.rel target = $region3
    $region8: #{tpu_custom_call.1} parent=1 // loop_exit
      _
    %1536 = vsyncpa [#allocation3], 1
    %s1537 = scalar_lea.sflag [#allocation3], 1
    %1538 = vsyncpa %s1537, 1
    %1539 = vsyncpa [#allocation6], 1
    %s1540 = scalar_lea.sflag [#allocation6], 1
    %1541 = vsyncpa %s1540, 1
    %1542 = vsyncpa [#allocation9], 1
    %s1543 = scalar_lea.sflag [#allocation9], 1
    %1544 = vsyncpa %s1543, 1
    %1545 = vsyncpa [#allocation4], 1
    %s1546 = scalar_lea.sflag [#allocation4], 1
    %1547 = vsyncpa %s1546, 1

</llo_original>
